<compile_context>
chip_gen: v5e
topology: v5e:2x2
jax: 0.10.0
libtpu: 0.0.40
codegen_flags: <defaults>
</compile_context>

<pallas_src>
import jax
import jax.numpy as jnp
from jax.experimental import pallas as pl
from jax.experimental.pallas import tpu as pltpu

NUM_HEADS = 4
LN_EPS = 1e-5
ROPE_THETA = 10000.0
MXU_DTYPE = jnp.bfloat16      # MXU input dtype (f32 accumulation everywhere)

# Packed-row order for the tiny per-layer tensors (one fat DMA per layer).
SMALL_ROWS = ("ln1g", "ln1b", "bq", "bk", "bv", "bo", "ln2g", "ln2b", "b1", "b2")


# ----------------------------- kernel helpers ------------------------------

def _layernorm(x, g, b):
    mu = jnp.mean(x, axis=-1, keepdims=True)
    var = jnp.mean((x - mu) ** 2, axis=-1, keepdims=True)
    return (x - mu) * jax.lax.rsqrt(var + LN_EPS) * g + b


def _rope(t, cos, sin):
    # t: (B, S, NH, hd); cos/sin: (1, S, 1, hd) -- rotate-half applied once to
    # all heads.
    # TODO(synk): once hd fills a lane (>=128), replace the concat with
    #             pltpu.roll(t, hd//2, axis=-1) and a precomputed signed-sin
    #             table so RoPE rides the otherwise-idle XLU slot.
    hd = t.shape[-1]
    t1 = t[..., : hd // 2]
    t2 = t[..., hd // 2:]
    rot = jnp.concatenate([-t2, t1], axis=-1)
    return t * cos + rot * sin


# ------------------------------- Pallas kernel ------------------------------

def fused_transformer_kernel(
    # inputs
    x_ref,                                   # (B, S, H)   f32 (read at l==0)
    cos_ref, sin_ref,                        # (S, hd)     f32
    small_ref,                               # (1, 10, PMAX) f32 packed LN/biases
    wq_ref, wk_ref, wv_ref, wo_ref,          # (1, H, H)   bf16
    w1_ref,                                  # (1, H, FF)  bf16
    w2_ref,                                  # (1, FF, H)  bf16
    # outputs
    out_ref,                                 # (B, S, H)   f32 (written at l==L-1)
    # scratch
    x_scr,                                   # (B*S, H)    f32 residual stream
):
    l = pl.program_id(0)

    @pl.when(l == 0)
    def _():
        x_scr[...] = x_ref[...].reshape(x_scr.shape)

    B, S, H = x_ref.shape
    BS = B * S
    FF = w1_ref.shape[2]
    hd = H // NUM_HEADS
    scale = 1.0 / (hd ** 0.5)

    # Unpack the small per-layer params (static slices of one VMEM tile).
    sp = small_ref[0]                        # (10, PMAX) f32
    ln1g, ln1b = sp[0:1, :H], sp[1:2, :H]
    bq, bk = sp[2:3, :H], sp[3:4, :H]
    bv, bo = sp[4:5, :H], sp[5:6, :H]
    ln2g, ln2b = sp[6:7, :H], sp[7:8, :H]
    b1 = sp[8:9, :FF]
    b2 = sp[9:10, :H]

    x = x_scr[...]                           # (B*S, H) f32

    # ---- attention sub-block (pre-LN, causal, RoPE) ----
    xn = _layernorm(x, ln1g, ln1b).astype(MXU_DTYPE)
    q = jnp.dot(xn, wq_ref[0], preferred_element_type=jnp.float32) + bq
    k = jnp.dot(xn, wk_ref[0], preferred_element_type=jnp.float32) + bk
    v = jnp.dot(xn, wv_ref[0], preferred_element_type=jnp.float32) + bv

    qr = q.reshape(B, S, NUM_HEADS, hd)
    kr = k.reshape(B, S, NUM_HEADS, hd)
    vr = v.reshape(B, S, NUM_HEADS, hd)
    cos = cos_ref[...][None, :, None, :]     # (1, S, 1, hd): broadcast over B, heads
    sin = sin_ref[...][None, :, None, :]
    qr = _rope(qr, cos, sin)                 # RoPE applied once (all heads)
    kr = _rope(kr, cos, sin)

    # Materialize heads-leading layout ONCE per layer (lane-contiguous hd last),
    # then run the attention as plain 3-D batched matmuls over (B*NH).
    def heads_first(t):                      # (B, S, NH, hd) -> (B*NH, S, hd)
        return jnp.transpose(t, (0, 2, 1, 3)).reshape(B * NUM_HEADS, S, hd)

    qh = heads_first(qr).astype(MXU_DTYPE)
    kh = heads_first(kr).astype(MXU_DTYPE)
    vh = heads_first(vr).astype(MXU_DTYPE)

    s = jnp.einsum("bqd,bkd->bqk", qh, kh,
                   preferred_element_type=jnp.float32) * scale

    # In-kernel causal bias (VPU iota/compare, no (S,S) input DMA).
    rows = jax.lax.broadcasted_iota(jnp.int32, (S, S), 0)
    cols = jax.lax.broadcasted_iota(jnp.int32, (S, S), 1)
    causal_bias = jnp.where(rows >= cols, 0.0, -1e30).astype(jnp.float32)
    s = s + causal_bias[None, :, :]

    m = jnp.max(s, axis=-1, keepdims=True)
    p = jnp.exp(s - m)
    denom = jnp.sum(p, axis=-1, keepdims=True)
    p = (p * pl.reciprocal(denom, approx=True)).astype(MXU_DTYPE)

    o = jnp.einsum("bqk,bkd->bqd", p, vh,
                   preferred_element_type=jnp.float32)          # (B*NH, S, hd)
    o = jnp.transpose(o.reshape(B, NUM_HEADS, S, hd),
                      (0, 2, 1, 3)).reshape(BS, H)               # back to rows
    attn = jnp.dot(o.astype(MXU_DTYPE), wo_ref[0],
                   preferred_element_type=jnp.float32) + bo
    x = x + attn

    # ---- FFN sub-block (pre-LN) ----
    xn2 = _layernorm(x, ln2g, ln2b).astype(MXU_DTYPE)
    h1 = jnp.dot(xn2, w1_ref[0], preferred_element_type=jnp.float32) + b1
    h1 = jax.nn.gelu(h1, approximate=True).astype(MXU_DTYPE)
    h2 = jnp.dot(h1, w2_ref[0], preferred_element_type=jnp.float32) + b2
    x = x + h2

    x_scr[...] = x

    @pl.when(l == pl.num_programs(0) - 1)
    def _():
        out_ref[...] = x.reshape(out_ref.shape).astype(out_ref.dtype)


# --------------------------------- wrapper -----------------------------------

def _pick_vmem_limit_bytes():
    """Per-generation VMEM budget: ~85% of physical, capped at 110 MiB.

    Falls back to a v7x-safe 64 MiB assumption if the query is unavailable.
    """
    cap = 64 * 1024 * 1024
    try:
        info = pltpu.get_tpu_info()
        cap = int(getattr(info, "vmem_capacity_bytes", cap) or cap)
    except Exception:
        pass
    return min(int(cap * 0.85), 110 * 1024 * 1024)


def pack_small_params(params, H, FF):
    """Pack LN params + all biases into one (L, 10, max(H,FF)) f32 array."""
    pmax = max(H, FF)
    rows = []
    for name in SMALL_ROWS:
        a = params[name].astype(jnp.float32)             # (L, n)
        a = jnp.pad(a, ((0, 0), (0, pmax - a.shape[-1])))
        rows.append(a[:, None, :])                       # (L, 1, pmax)
    return jnp.concatenate(rows, axis=1)                 # (L, 10, pmax)


def generic_transformer_forward(x, params, cos, sin):
    """All L layers fused into one pallas_call; grid = (layer,). Batch inside."""
    B, S, H = x.shape
    L, _, FF = params["w1"].shape
    hd = H // NUM_HEADS
    pmax = max(H, FF)

    # transformer.drop: torch.nn.Dropout() -> identity in eval mode.
    # TODO(synk): training-mode dropout (pltpu.prng_seed/prng_random_bits) is
    # not implemented; eval semantics used.

    small = pack_small_params(params, H, FF)             # (L, 10, pmax)

    def per_layer(d1, d2):
        return pl.BlockSpec((1, d1, d2), lambda l: (l, 0, 0))

    def const2d(d1, d2):
        return pl.BlockSpec((d1, d2), lambda l: (0, 0))

    in_specs = [
        pl.BlockSpec((B, S, H), lambda l: (0, 0, 0)),     # x (read once at l==0)
        const2d(S, hd), const2d(S, hd),                   # rope cos, sin
        per_layer(len(SMALL_ROWS), pmax),                 # packed LN params + biases
        per_layer(H, H), per_layer(H, H),                 # wq, wk
        per_layer(H, H), per_layer(H, H),                 # wv, wo
        per_layer(H, FF),                                 # w1
        per_layer(FF, H),                                 # w2
    ]
    out_specs = pl.BlockSpec((B, S, H), lambda l: (0, 0, 0))

    # Advisory cost hint for the XLA scheduler.
    flops = 2 * B * L * S * (4 * H * H + 2 * S * H + 2 * H * FF)
    transcendentals = B * L * S * (NUM_HEADS * S + FF + NUM_HEADS + 2)
    weight_bytes = L * ((4 * H * H + 2 * H * FF) * 2 + len(SMALL_ROWS) * pmax * 4)
    bytes_accessed = 2 * B * S * H * 4 + weight_bytes + 2 * S * hd * 4

    return pl.pallas_call(
        fused_transformer_kernel,
        out_shape=jax.ShapeDtypeStruct((B, S, H), x.dtype),
        grid=(L,),
        in_specs=in_specs,
        out_specs=out_specs,
        scratch_shapes=[pltpu.VMEM((B * S, H), jnp.float32)],
        # NOTE: x's buffer is donated (residual updated in place); callers must
        # not reuse x after this call.
        input_output_aliases={0: 0},
        compiler_params=pltpu.CompilerParams(
            dimension_semantics=("arbitrary",),
            vmem_limit_bytes=_pick_vmem_limit_bytes()),
        cost_estimate=pl.CostEstimate(
            flops=flops, transcendentals=transcendentals,
            bytes_accessed=bytes_accessed),
    )(
        x, cos, sin, small,
        params["wq"], params["wk"], params["wv"], params["wo"],
        params["w1"], params["w2"],
    )


# ---------------------------- pure-JAX reference ----------------------------

def _ref_block(x, p, cos, sin):
    f32 = lambda a: a.astype(jnp.float32)
    B, S, H = x.shape
    hd = H // NUM_HEADS
    scale = 1.0 / (hd ** 0.5)
    xn = _layernorm(x, f32(p["ln1g"]), f32(p["ln1b"]))
    q = xn @ f32(p["wq"]) + f32(p["bq"])
    k = xn @ f32(p["wk"]) + f32(p["bk"])
    v = xn @ f32(p["wv"]) + f32(p["bv"])

    def rope4(t):
        t = t.reshape(B, S, NUM_HEADS, hd)
        t1, t2 = t[..., : hd // 2], t[..., hd // 2:]
        rot = jnp.concatenate([-t2, t1], axis=-1)
        return t * cos[None, :, None, :] + rot * sin[None, :, None, :]

    qh, kh = rope4(q), rope4(k)
    vh = v.reshape(B, S, NUM_HEADS, hd)
    s = jnp.einsum("bqnd,bknd->bnqk", qh, kh) * scale
    causal = jnp.tril(jnp.ones((S, S), bool))
    s = jnp.where(causal[None, None], s, -1e30)
    p_attn = jax.nn.softmax(s, axis=-1)
    o = jnp.einsum("bnqk,bknd->bqnd", p_attn, vh).reshape(B, S, H)
    x = x + o @ f32(p["wo"]) + f32(p["bo"])
    xn2 = _layernorm(x, f32(p["ln2g"]), f32(p["ln2b"]))
    h1 = jax.nn.gelu(xn2 @ f32(p["w1"]) + f32(p["b1"]), approximate=True)
    return x + h1 @ f32(p["w2"]) + f32(p["b2"])


# --------------------------------- setup ------------------------------------

def make_params(key, H, FF, num_layers, w_dtype=MXU_DTYPE):
    layers = []
    for i in range(num_layers):
        ks = jax.random.split(jax.random.fold_in(key, i), 6)
        s = 0.02
        layers.append(dict(
            ln1g=jnp.ones((H,), jnp.float32), ln1b=jnp.zeros((H,), jnp.float32),
            wq=(s * jax.random.normal(ks[0], (H, H), jnp.float32)).astype(w_dtype),
            bq=jnp.zeros((H,), jnp.float32),
            wk=(s * jax.random.normal(ks[1], (H, H), jnp.float32)).astype(w_dtype),
            bk=jnp.zeros((H,), jnp.float32),
            wv=(s * jax.random.normal(ks[2], (H, H), jnp.float32)).astype(w_dtype),
            bv=jnp.zeros((H,), jnp.float32),
            wo=(s * jax.random.normal(ks[3], (H, H), jnp.float32)).astype(w_dtype),
            bo=jnp.zeros((H,), jnp.float32),
            ln2g=jnp.ones((H,), jnp.float32), ln2b=jnp.zeros((H,), jnp.float32),
            w1=(s * jax.random.normal(ks[4], (H, FF), jnp.float32)).astype(w_dtype),
            b1=jnp.zeros((FF,), jnp.float32),
            w2=(s * jax.random.normal(ks[5], (FF, H), jnp.float32)).astype(w_dtype),
            b2=jnp.zeros((H,), jnp.float32),
        ))
    # stack per-layer dicts into a dict of (L, ...) arrays (for the fused kernel)
    return jax.tree_util.tree_map(lambda *xs: jnp.stack(xs), *layers)


def make_rope(S, hd):
    inv_freq = 1.0 / (ROPE_THETA ** (jnp.arange(0, hd, 2, dtype=jnp.float32) / hd))
    pos = jnp.arange(S, dtype=jnp.float32)
    freqs = pos[:, None] * inv_freq[None, :]          # (S, hd/2)
    emb = jnp.concatenate([freqs, freqs], axis=-1)    # (S, hd)
    return jnp.cos(emb), jnp.sin(emb)


if __name__ == "__main__":
    B, S, H = 2, 8, 32          # batch, context_window, hidden_dim
    FF = 4 * H                  # ffn hidden dim
    NUM_LAYERS = 2

    key = jax.random.PRNGKey(0)
    kx, kp = jax.random.split(key)
    x = jax.random.normal(kx, (B, S, H), jnp.float32)
    params = make_params(kp, H, FF, NUM_LAYERS)
    cos, sin = make_rope(S, H // NUM_HEADS)

    # Pure-JAX reference first (kernel aliases/donates x's buffer to the output).
    ref = x
    for i in range(NUM_LAYERS):
        p_i = {k: v[i] for k, v in params.items()}
        ref = _ref_block(ref, p_i, cos, sin)
    ref = jax.block_until_ready(ref)

    out = generic_transformer_forward(x, params, cos, sin)
    out = jax.block_until_ready(out)

    assert out.shape == (B, S, H)
    # bf16 MXU inputs + approx reciprocal in softmax => slightly looser tolerance
    # than a strict f32 path (reference uses the same bf16-stored weights).
    assert jnp.allclose(out, ref, atol=1e-2, rtol=1e-2), "mismatch vs reference"

    print("KERNEL_OK")
</pallas_src>

<mosaic_0001>
module attributes {stable_mosaic.version = 11 : i64} {
  func.func @fused_transformer_kernel(%arg0: i32, %arg1: memref<2x8x32xf32, #tpu.memory_space<vmem>>, %arg2: memref<8x8xf32, #tpu.memory_space<vmem>>, %arg3: memref<8x8xf32, #tpu.memory_space<vmem>>, %arg4: memref<1x10x128xf32, #tpu.memory_space<vmem>>, %arg5: memref<1x32x32xbf16, #tpu.memory_space<vmem>>, %arg6: memref<1x32x32xbf16, #tpu.memory_space<vmem>>, %arg7: memref<1x32x32xbf16, #tpu.memory_space<vmem>>, %arg8: memref<1x32x32xbf16, #tpu.memory_space<vmem>>, %arg9: memref<1x32x128xbf16, #tpu.memory_space<vmem>>, %arg10: memref<1x128x32xbf16, #tpu.memory_space<vmem>>, %arg11: memref<2x8x32xf32, #tpu.memory_space<vmem>>, %arg12: memref<16x32xf32, #tpu.memory_space<vmem>>) attributes {dimension_semantics = [#tpu.dimension_semantics<arbitrary>], iteration_bounds = array<i64: 2>, scalar_prefetch = 0 : i64, scratch_operands = 1 : i64, tpu.core_type = #tpu.core_type<tc>, window_params = [{pipeline_mode = #tpu.pipeline_mode<synchronous>, transform_indices = @transform_0, window_bounds = array<i64: 2, 8, 32>}, {pipeline_mode = #tpu.pipeline_mode<synchronous>, transform_indices = @transform_1, window_bounds = array<i64: 8, 8>}, {pipeline_mode = #tpu.pipeline_mode<synchronous>, transform_indices = @transform_2, window_bounds = array<i64: 8, 8>}, {transform_indices = @transform_3, window_bounds = array<i64: 1, 10, 128>}, {transform_indices = @transform_4, window_bounds = array<i64: 1, 32, 32>}, {transform_indices = @transform_5, window_bounds = array<i64: 1, 32, 32>}, {transform_indices = @transform_6, window_bounds = array<i64: 1, 32, 32>}, {transform_indices = @transform_7, window_bounds = array<i64: 1, 32, 32>}, {transform_indices = @transform_8, window_bounds = array<i64: 1, 32, 128>}, {transform_indices = @transform_9, window_bounds = array<i64: 1, 128, 32>}, {pipeline_mode = #tpu.pipeline_mode<synchronous>, transform_indices = @transform_10, window_bounds = array<i64: 2, 8, 32>}]} {
    %c0_i32 = arith.constant 0 : i32
    %0 = arith.cmpi eq, %arg0, %c0_i32 : i32
    %1 = arith.extui %0 : i1 to i32
    %c0_i32_0 = arith.constant 0 : i32
    %2 = arith.cmpi ne, %1, %c0_i32_0 : i32
    scf.if %2 {
      %c0_58 = arith.constant 0 : index
      %c0_59 = arith.constant 0 : index
      %c0_60 = arith.constant 0 : index
      %176 = vector.load %arg1[%c0_58, %c0_59, %c0_60] : memref<2x8x32xf32, #tpu.memory_space<vmem>>, vector<2x8x32xf32>
      %177 = vector.shape_cast %176 : vector<2x8x32xf32> to vector<16x32xf32>
      %c0_61 = arith.constant 0 : index
      %c0_62 = arith.constant 0 : index
      %178 = vector.load %arg12[%c0_61, %c0_62] : memref<16x32xf32, #tpu.memory_space<vmem>>, vector<16x32xf32>
      tpu.vector_store %arg12[%c0_61, %c0_62], %177 {strides = array<i32>} : memref<16x32xf32, #tpu.memory_space<vmem>>, vector<16x32xf32>,
    } else {
    }
    %c0 = arith.constant 0 : index
    %c0_1 = arith.constant 0 : index
    %c0_2 = arith.constant 0 : index
    %3 = vector.load %arg4[%c0, %c0_1, %c0_2] : memref<1x10x128xf32, #tpu.memory_space<vmem>>, vector<1x10x128xf32>
    %4 = vector.shape_cast %3 : vector<1x10x128xf32> to vector<10x128xf32>
    %5 = vector.extract_strided_slice %4 {offsets = [0, 0], sizes = [1, 32], strides = [1, 1]} : vector<10x128xf32> to vector<1x32xf32>
    %6 = vector.extract_strided_slice %4 {offsets = [1, 0], sizes = [1, 32], strides = [1, 1]} : vector<10x128xf32> to vector<1x32xf32>
    %7 = vector.extract_strided_slice %4 {offsets = [2, 0], sizes = [1, 32], strides = [1, 1]} : vector<10x128xf32> to vector<1x32xf32>
    %8 = vector.extract_strided_slice %4 {offsets = [3, 0], sizes = [1, 32], strides = [1, 1]} : vector<10x128xf32> to vector<1x32xf32>
    %9 = vector.extract_strided_slice %4 {offsets = [4, 0], sizes = [1, 32], strides = [1, 1]} : vector<10x128xf32> to vector<1x32xf32>
    %10 = vector.extract_strided_slice %4 {offsets = [5, 0], sizes = [1, 32], strides = [1, 1]} : vector<10x128xf32> to vector<1x32xf32>
    %11 = vector.extract_strided_slice %4 {offsets = [6, 0], sizes = [1, 32], strides = [1, 1]} : vector<10x128xf32> to vector<1x32xf32>
    %12 = vector.extract_strided_slice %4 {offsets = [7, 0], sizes = [1, 32], strides = [1, 1]} : vector<10x128xf32> to vector<1x32xf32>
    %13 = vector.extract_strided_slice %4 {offsets = [8, 0], sizes = [1, 128], strides = [1, 1]} : vector<10x128xf32> to vector<1x128xf32>
    %14 = vector.extract_strided_slice %4 {offsets = [9, 0], sizes = [1, 32], strides = [1, 1]} : vector<10x128xf32> to vector<1x32xf32>
    %c0_3 = arith.constant 0 : index
    %c0_4 = arith.constant 0 : index
    %15 = vector.load %arg12[%c0_3, %c0_4] : memref<16x32xf32, #tpu.memory_space<vmem>>, vector<16x32xf32>
    %cst = arith.constant dense<0.000000e+00> : vector<16xf32>
    %16 = vector.multi_reduction <add>, %15, %cst [1] : vector<16x32xf32> to vector<16xf32>
    %17 = vector.shape_cast %16 : vector<16xf32> to vector<16x1xf32>
    %cst_5 = arith.constant 3.200000e+01 : f32
    %18 = vector.broadcast %cst_5 : f32 to vector<16x1xf32>
    %19 = arith.divf %17, %18 : vector<16x1xf32>
    %20 = vector.broadcast %19 : vector<16x1xf32> to vector<16x32xf32>
    %21 = arith.subf %15, %20 : vector<16x32xf32>
    %22 = arith.mulf %21, %21 : vector<16x32xf32>
    %cst_6 = arith.constant dense<0.000000e+00> : vector<16xf32>
    %23 = vector.multi_reduction <add>, %22, %cst_6 [1] : vector<16x32xf32> to vector<16xf32>
    %24 = vector.shape_cast %23 : vector<16xf32> to vector<16x1xf32>
    %cst_7 = arith.constant 3.200000e+01 : f32
    %25 = vector.broadcast %cst_7 : f32 to vector<16x1xf32>
    %26 = arith.divf %24, %25 : vector<16x1xf32>
    %27 = vector.broadcast %19 : vector<16x1xf32> to vector<16x32xf32>
    %28 = arith.subf %15, %27 : vector<16x32xf32>
    %cst_8 = arith.constant 9.99999974E-6 : f32
    %29 = vector.broadcast %cst_8 : f32 to vector<16x1xf32>
    %30 = arith.addf %26, %29 : vector<16x1xf32>
    %31 = math.rsqrt %30 : vector<16x1xf32>
    %32 = vector.broadcast %31 : vector<16x1xf32> to vector<16x32xf32>
    %33 = arith.mulf %28, %32 : vector<16x32xf32>
    %34 = vector.broadcast %5 : vector<1x32xf32> to vector<16x32xf32>
    %35 = arith.mulf %33, %34 : vector<16x32xf32>
    %36 = vector.broadcast %6 : vector<1x32xf32> to vector<16x32xf32>
    %37 = arith.addf %35, %36 : vector<16x32xf32>
    %38 = arith.truncf %37 : vector<16x32xf32> to vector<16x32xbf16>
    %c0_9 = arith.constant 0 : index
    %c0_10 = arith.constant 0 : index
    %c0_11 = arith.constant 0 : index
    %39 = vector.load %arg5[%c0_9, %c0_10, %c0_11] : memref<1x32x32xbf16, #tpu.memory_space<vmem>>, vector<1x32x32xbf16>
    %40 = vector.shape_cast %39 : vector<1x32x32xbf16> to vector<32x32xbf16>
    %cst_12 = arith.constant dense<0.000000e+00> : vector<16x32xf32>
    %41 = tpu.matmul %38, %40, %cst_12 {dimension_numbers = #tpu.dot_dimension_numbers<[1], [0], [0], [1], [0, 0, 1, 1], [], []>} : vector<16x32xbf16>, vector<32x32xbf16>, vector<16x32xf32> -> vector<16x32xf32>
    %42 = vector.broadcast %7 : vector<1x32xf32> to vector<16x32xf32>
    %43 = arith.addf %41, %42 : vector<16x32xf32>
    %c0_13 = arith.constant 0 : index
    %c0_14 = arith.constant 0 : index
    %c0_15 = arith.constant 0 : index
    %44 = vector.load %arg6[%c0_13, %c0_14, %c0_15] : memref<1x32x32xbf16, #tpu.memory_space<vmem>>, vector<1x32x32xbf16>
    %45 = vector.shape_cast %44 : vector<1x32x32xbf16> to vector<32x32xbf16>
    %cst_16 = arith.constant dense<0.000000e+00> : vector<16x32xf32>
    %46 = tpu.matmul %38, %45, %cst_16 {dimension_numbers = #tpu.dot_dimension_numbers<[1], [0], [0], [1], [0, 0, 1, 1], [], []>} : vector<16x32xbf16>, vector<32x32xbf16>, vector<16x32xf32> -> vector<16x32xf32>
    %47 = vector.broadcast %8 : vector<1x32xf32> to vector<16x32xf32>
    %48 = arith.addf %46, %47 : vector<16x32xf32>
    %c0_17 = arith.constant 0 : index
    %c0_18 = arith.constant 0 : index
    %c0_19 = arith.constant 0 : index
    %49 = vector.load %arg7[%c0_17, %c0_18, %c0_19] : memref<1x32x32xbf16, #tpu.memory_space<vmem>>, vector<1x32x32xbf16>
    %50 = vector.shape_cast %49 : vector<1x32x32xbf16> to vector<32x32xbf16>
    %cst_20 = arith.constant dense<0.000000e+00> : vector<16x32xf32>
    %51 = tpu.matmul %38, %50, %cst_20 {dimension_numbers = #tpu.dot_dimension_numbers<[1], [0], [0], [1], [0, 0, 1, 1], [], []>} : vector<16x32xbf16>, vector<32x32xbf16>, vector<16x32xf32> -> vector<16x32xf32>
    %52 = vector.broadcast %9 : vector<1x32xf32> to vector<16x32xf32>
    %53 = arith.addf %51, %52 : vector<16x32xf32>
    %54 = vector.shape_cast %43 : vector<16x32xf32> to vector<2x8x4x8xf32>
    %55 = vector.shape_cast %48 : vector<16x32xf32> to vector<2x8x4x8xf32>
    %56 = vector.shape_cast %53 : vector<16x32xf32> to vector<2x8x4x8xf32>
    %c0_21 = arith.constant 0 : index
    %c0_22 = arith.constant 0 : index
    %57 = vector.load %arg2[%c0_21, %c0_22] : memref<8x8xf32, #tpu.memory_space<vmem>>, vector<8x8xf32>
    %58 = vector.shape_cast %57 : vector<8x8xf32> to vector<1x8x1x8xf32>
    %c0_23 = arith.constant 0 : index
    %c0_24 = arith.constant 0 : index
    %59 = vector.load %arg3[%c0_23, %c0_24] : memref<8x8xf32, #tpu.memory_space<vmem>>, vector<8x8xf32>
    %60 = vector.shape_cast %59 : vector<8x8xf32> to vector<1x8x1x8xf32>
    %61 = vector.extract_strided_slice %54 {offsets = [0, 0, 0, 0], sizes = [2, 8, 4, 4], strides = [1, 1, 1, 1]} : vector<2x8x4x8xf32> to vector<2x8x4x4xf32>
    %62 = vector.extract_strided_slice %54 {offsets = [0, 0, 0, 4], sizes = [2, 8, 4, 4], strides = [1, 1, 1, 1]} : vector<2x8x4x8xf32> to vector<2x8x4x4xf32>
    %cst_25 = arith.constant 0.000000e+00 : f32
    %63 = vector.broadcast %cst_25 : f32 to vector<2x8x4x4xf32>
    %64 = arith.subf %63, %62 : vector<2x8x4x4xf32>
    %65 = tpu.concatenate %64, %61 in 3 : vector<2x8x4x4xf32>, vector<2x8x4x4xf32> -> vector<2x8x4x8xf32>
    %66 = vector.broadcast %58 : vector<1x8x1x8xf32> to vector<2x8x4x8xf32>
    %67 = arith.mulf %54, %66 : vector<2x8x4x8xf32>
    %68 = vector.broadcast %60 : vector<1x8x1x8xf32> to vector<2x8x4x8xf32>
    %69 = arith.mulf %65, %68 : vector<2x8x4x8xf32>
    %70 = arith.addf %67, %69 : vector<2x8x4x8xf32>
    %71 = vector.extract_strided_slice %55 {offsets = [0, 0, 0, 0], sizes = [2, 8, 4, 4], strides = [1, 1, 1, 1]} : vector<2x8x4x8xf32> to vector<2x8x4x4xf32>
    %72 = vector.extract_strided_slice %55 {offsets = [0, 0, 0, 4], sizes = [2, 8, 4, 4], strides = [1, 1, 1, 1]} : vector<2x8x4x8xf32> to vector<2x8x4x4xf32>
    %cst_26 = arith.constant 0.000000e+00 : f32
    %73 = vector.broadcast %cst_26 : f32 to vector<2x8x4x4xf32>
    %74 = arith.subf %73, %72 : vector<2x8x4x4xf32>
    %75 = tpu.concatenate %74, %71 in 3 : vector<2x8x4x4xf32>, vector<2x8x4x4xf32> -> vector<2x8x4x8xf32>
    %76 = vector.broadcast %58 : vector<1x8x1x8xf32> to vector<2x8x4x8xf32>
    %77 = arith.mulf %55, %76 : vector<2x8x4x8xf32>
    %78 = vector.broadcast %60 : vector<1x8x1x8xf32> to vector<2x8x4x8xf32>
    %79 = arith.mulf %75, %78 : vector<2x8x4x8xf32>
    %80 = arith.addf %77, %79 : vector<2x8x4x8xf32>
    %81 = tpu.transpose %70, [0, 2, 1, 3] : vector<2x8x4x8xf32> -> vector<2x4x8x8xf32>
    %82 = vector.shape_cast %81 : vector<2x4x8x8xf32> to vector<8x8x8xf32>
    %83 = arith.truncf %82 : vector<8x8x8xf32> to vector<8x8x8xbf16>
    %84 = tpu.transpose %80, [0, 2, 1, 3] : vector<2x8x4x8xf32> -> vector<2x4x8x8xf32>
    %85 = vector.shape_cast %84 : vector<2x4x8x8xf32> to vector<8x8x8xf32>
    %86 = arith.truncf %85 : vector<8x8x8xf32> to vector<8x8x8xbf16>
    %87 = tpu.transpose %56, [0, 2, 1, 3] : vector<2x8x4x8xf32> -> vector<2x4x8x8xf32>
    %88 = vector.shape_cast %87 : vector<2x4x8x8xf32> to vector<8x8x8xf32>
    %89 = arith.truncf %88 : vector<8x8x8xf32> to vector<8x8x8xbf16>
    "tpu.trace_start"() <{level = 10 : i32, message = "bqd,bkd->bqk"}> : () -> ()
    %cst_27 = arith.constant dense<0.000000e+00> : vector<8x8x8xf32>
    %90 = tpu.matmul %83, %86, %cst_27 {dimension_numbers = #tpu.dot_dimension_numbers<[2], [2], [1], [1], [0, 0, 0, 1, 1, 1], [0], [0]>} : vector<8x8x8xbf16>, vector<8x8x8xbf16>, vector<8x8x8xf32> -> vector<8x8x8xf32>
    "tpu.trace_stop"() : () -> ()
    %cst_28 = arith.constant 0.353553385 : f32
    %91 = vector.broadcast %cst_28 : f32 to vector<8x8x8xf32>
    %92 = arith.mulf %90, %91 : vector<8x8x8xf32>
    %93 = tpu.iota {dimensions = array<i32: 0>} : vector<8x8xi32>
    %94 = tpu.iota {dimensions = array<i32: 1>} : vector<8x8xi32>
    %95 = arith.cmpi sge, %93, %94 : vector<8x8xi32>
    %cst_29 = arith.constant 0.000000e+00 : f32
    %cst_30 = arith.constant -1.000000e+30 : f32
    %96 = vector.broadcast %cst_29 : f32 to vector<8x8xf32>
    %97 = vector.broadcast %cst_30 : f32 to vector<8x8xf32>
    %98 = arith.select %95, %96, %97 : vector<8x8xi1>, vector<8x8xf32>
    %99 = vector.shape_cast %98 : vector<8x8xf32> to vector<1x8x8xf32>
    %100 = vector.broadcast %99 : vector<1x8x8xf32> to vector<8x8x8xf32>
    %101 = arith.addf %92, %100 : vector<8x8x8xf32>
    %cst_31 = arith.constant dense<0xFF800000> : vector<8x8xf32>
    %102 = vector.multi_reduction <maximumf>, %101, %cst_31 [2] : vector<8x8x8xf32> to vector<8x8xf32>
    %103 = vector.shape_cast %102 : vector<8x8xf32> to vector<8x8x1xf32>
    %104 = vector.broadcast %103 : vector<8x8x1xf32> to vector<8x8x8xf32>
    %105 = arith.subf %101, %104 : vector<8x8x8xf32>
    %106 = math.exp %105 : vector<8x8x8xf32>
    %cst_32 = arith.constant dense<0.000000e+00> : vector<8x8xf32>
    %107 = vector.multi_reduction <add>, %106, %cst_32 [2] : vector<8x8x8xf32> to vector<8x8xf32>
    %108 = vector.shape_cast %107 : vector<8x8xf32> to vector<8x8x1xf32>
    %109 = tpu.reciprocal %108 {approx = true} : vector<8x8x1xf32> -> vector<8x8x1xf32>
    %110 = vector.broadcast %109 : vector<8x8x1xf32> to vector<8x8x8xf32>
    %111 = arith.mulf %106, %110 : vector<8x8x8xf32>
    %112 = arith.truncf %111 : vector<8x8x8xf32> to vector<8x8x8xbf16>
    "tpu.trace_start"() <{level = 10 : i32, message = "bqk,bkd->bqd"}> : () -> ()
    %cst_33 = arith.constant dense<0.000000e+00> : vector<8x8x8xf32>
    %113 = tpu.matmul %112, %89, %cst_33 {dimension_numbers = #tpu.dot_dimension_numbers<[2], [1], [1], [2], [0, 0, 0, 1, 1, 2], [0], [0]>} : vector<8x8x8xbf16>, vector<8x8x8xbf16>, vector<8x8x8xf32> -> vector<8x8x8xf32>
    "tpu.trace_stop"() : () -> ()
    %114 = vector.shape_cast %113 : vector<8x8x8xf32> to vector<2x4x8x8xf32>
    %115 = tpu.transpose %114, [0, 2, 1, 3] : vector<2x4x8x8xf32> -> vector<2x8x4x8xf32>
    %116 = vector.shape_cast %115 : vector<2x8x4x8xf32> to vector<16x32xf32>
    %117 = arith.truncf %116 : vector<16x32xf32> to vector<16x32xbf16>
    %c0_34 = arith.constant 0 : index
    %c0_35 = arith.constant 0 : index
    %c0_36 = arith.constant 0 : index
    %118 = vector.load %arg8[%c0_34, %c0_35, %c0_36] : memref<1x32x32xbf16, #tpu.memory_space<vmem>>, vector<1x32x32xbf16>
    %119 = vector.shape_cast %118 : vector<1x32x32xbf16> to vector<32x32xbf16>
    %cst_37 = arith.constant dense<0.000000e+00> : vector<16x32xf32>
    %120 = tpu.matmul %117, %119, %cst_37 {dimension_numbers = #tpu.dot_dimension_numbers<[1], [0], [0], [1], [0, 0, 1, 1], [], []>} : vector<16x32xbf16>, vector<32x32xbf16>, vector<16x32xf32> -> vector<16x32xf32>
    %121 = vector.broadcast %10 : vector<1x32xf32> to vector<16x32xf32>
    %122 = arith.addf %120, %121 : vector<16x32xf32>
    %123 = arith.addf %15, %122 : vector<16x32xf32>
    %cst_38 = arith.constant dense<0.000000e+00> : vector<16xf32>
    %124 = vector.multi_reduction <add>, %123, %cst_38 [1] : vector<16x32xf32> to vector<16xf32>
    %125 = vector.shape_cast %124 : vector<16xf32> to vector<16x1xf32>
    %cst_39 = arith.constant 3.200000e+01 : f32
    %126 = vector.broadcast %cst_39 : f32 to vector<16x1xf32>
    %127 = arith.divf %125, %126 : vector<16x1xf32>
    %128 = vector.broadcast %127 : vector<16x1xf32> to vector<16x32xf32>
    %129 = arith.subf %123, %128 : vector<16x32xf32>
    %130 = arith.mulf %129, %129 : vector<16x32xf32>
    %cst_40 = arith.constant dense<0.000000e+00> : vector<16xf32>
    %131 = vector.multi_reduction <add>, %130, %cst_40 [1] : vector<16x32xf32> to vector<16xf32>
    %132 = vector.shape_cast %131 : vector<16xf32> to vector<16x1xf32>
    %cst_41 = arith.constant 3.200000e+01 : f32
    %133 = vector.broadcast %cst_41 : f32 to vector<16x1xf32>
    %134 = arith.divf %132, %133 : vector<16x1xf32>
    %135 = vector.broadcast %127 : vector<16x1xf32> to vector<16x32xf32>
    %136 = arith.subf %123, %135 : vector<16x32xf32>
    %cst_42 = arith.constant 9.99999974E-6 : f32
    %137 = vector.broadcast %cst_42 : f32 to vector<16x1xf32>
    %138 = arith.addf %134, %137 : vector<16x1xf32>
    %139 = math.rsqrt %138 : vector<16x1xf32>
    %140 = vector.broadcast %139 : vector<16x1xf32> to vector<16x32xf32>
    %141 = arith.mulf %136, %140 : vector<16x32xf32>
    %142 = vector.broadcast %11 : vector<1x32xf32> to vector<16x32xf32>
    %143 = arith.mulf %141, %142 : vector<16x32xf32>
    %144 = vector.broadcast %12 : vector<1x32xf32> to vector<16x32xf32>
    %145 = arith.addf %143, %144 : vector<16x32xf32>
    %146 = arith.truncf %145 : vector<16x32xf32> to vector<16x32xbf16>
    %c0_43 = arith.constant 0 : index
    %c0_44 = arith.constant 0 : index
    %c0_45 = arith.constant 0 : index
    %147 = vector.load %arg9[%c0_43, %c0_44, %c0_45] : memref<1x32x128xbf16, #tpu.memory_space<vmem>>, vector<1x32x128xbf16>
    %148 = vector.shape_cast %147 : vector<1x32x128xbf16> to vector<32x128xbf16>
    %cst_46 = arith.constant dense<0.000000e+00> : vector<16x128xf32>
    %149 = tpu.matmul %146, %148, %cst_46 {dimension_numbers = #tpu.dot_dimension_numbers<[1], [0], [0], [1], [0, 0, 1, 1], [], []>} : vector<16x32xbf16>, vector<32x128xbf16>, vector<16x128xf32> -> vector<16x128xf32>
    %150 = vector.broadcast %13 : vector<1x128xf32> to vector<16x128xf32>
    %151 = arith.addf %149, %150 : vector<16x128xf32>
    %152 = arith.mulf %151, %151 : vector<16x128xf32>
    %153 = arith.mulf %151, %152 : vector<16x128xf32>
    %cst_47 = arith.constant 4.471500e-02 : f32
    %154 = vector.broadcast %cst_47 : f32 to vector<16x128xf32>
    %155 = arith.mulf %154, %153 : vector<16x128xf32>
    %156 = arith.addf %151, %155 : vector<16x128xf32>
    %cst_48 = arith.constant 0.797884583 : f32
    %157 = vector.broadcast %cst_48 : f32 to vector<16x128xf32>
    %158 = arith.mulf %157, %156 : vector<16x128xf32>
    %159 = math.tanh %158 : vector<16x128xf32>
    %cst_49 = arith.constant 1.000000e+00 : f32
    %160 = vector.broadcast %cst_49 : f32 to vector<16x128xf32>
    %161 = arith.addf %160, %159 : vector<16x128xf32>
    %cst_50 = arith.constant 5.000000e-01 : f32
    %162 = vector.broadcast %cst_50 : f32 to vector<16x128xf32>
    %163 = arith.mulf %162, %161 : vector<16x128xf32>
    %164 = arith.mulf %151, %163 : vector<16x128xf32>
    %165 = arith.truncf %164 : vector<16x128xf32> to vector<16x128xbf16>
    %c0_51 = arith.constant 0 : index
    %c0_52 = arith.constant 0 : index
    %c0_53 = arith.constant 0 : index
    %166 = vector.load %arg10[%c0_51, %c0_52, %c0_53] : memref<1x128x32xbf16, #tpu.memory_space<vmem>>, vector<1x128x32xbf16>
    %167 = vector.shape_cast %166 : vector<1x128x32xbf16> to vector<128x32xbf16>
    %cst_54 = arith.constant dense<0.000000e+00> : vector<16x32xf32>
    %168 = tpu.matmul %165, %167, %cst_54 {dimension_numbers = #tpu.dot_dimension_numbers<[1], [0], [0], [1], [0, 0, 1, 1], [], []>} : vector<16x128xbf16>, vector<128x32xbf16>, vector<16x32xf32> -> vector<16x32xf32>
    %169 = vector.broadcast %14 : vector<1x32xf32> to vector<16x32xf32>
    %170 = arith.addf %168, %169 : vector<16x32xf32>
    %171 = arith.addf %123, %170 : vector<16x32xf32>
    %c0_55 = arith.constant 0 : index
    %c0_56 = arith.constant 0 : index
    %172 = vector.load %arg12[%c0_55, %c0_56] : memref<16x32xf32, #tpu.memory_space<vmem>>, vector<16x32xf32>
    tpu.vector_store %arg12[%c0_55, %c0_56], %171 {strides = array<i32>} : memref<16x32xf32, #tpu.memory_space<vmem>>, vector<16x32xf32>,
    %c1_i32 = arith.constant 1 : i32
    %173 = arith.cmpi eq, %arg0, %c1_i32 : i32
    %174 = arith.extui %173 : i1 to i32
    %c0_i32_57 = arith.constant 0 : i32
    %175 = arith.cmpi ne, %174, %c0_i32_57 : i32
    scf.if %175 {
      %176 = vector.shape_cast %171 : vector<16x32xf32> to vector<2x8x32xf32>
      %c0_58 = arith.constant 0 : index
      %c0_59 = arith.constant 0 : index
      %c0_60 = arith.constant 0 : index
      %177 = vector.load %arg11[%c0_58, %c0_59, %c0_60] : memref<2x8x32xf32, #tpu.memory_space<vmem>>, vector<2x8x32xf32>
      tpu.vector_store %arg11[%c0_58, %c0_59, %c0_60], %176 {strides = array<i32>} : memref<2x8x32xf32, #tpu.memory_space<vmem>>, vector<2x8x32xf32>,
    } else {
    }
    return
  }
  func.func @transform_0(%arg0: i32) -> (i32, i32, i32) {
    %c0_i32 = arith.constant 0 : i32
    %c0_i32_0 = arith.constant 0 : i32
    %c0_i32_1 = arith.constant 0 : i32
    %c0_i32_2 = arith.constant 0 : i32
    return %c0_i32, %c0_i32_0, %c0_i32_1 : i32, i32, i32
  }
  func.func @transform_1(%arg0: i32) -> (i32, i32) {
    %c0_i32 = arith.constant 0 : i32
    %c0_i32_0 = arith.constant 0 : i32
    %c0_i32_1 = arith.constant 0 : i32
    return %c0_i32, %c0_i32_0 : i32, i32
  }
  func.func @transform_2(%arg0: i32) -> (i32, i32) {
    %c0_i32 = arith.constant 0 : i32
    %c0_i32_0 = arith.constant 0 : i32
    %c0_i32_1 = arith.constant 0 : i32
    return %c0_i32, %c0_i32_0 : i32, i32
  }
  func.func @transform_3(%arg0: i32) -> (i32, i32, i32) {
    %c0_i32 = arith.constant 0 : i32
    %c0_i32_0 = arith.constant 0 : i32
    %c0_i32_1 = arith.constant 0 : i32
    return %arg0, %c0_i32, %c0_i32_0 : i32, i32, i32
  }
  func.func @transform_4(%arg0: i32) -> (i32, i32, i32) {
    %c0_i32 = arith.constant 0 : i32
    %c0_i32_0 = arith.constant 0 : i32
    %c0_i32_1 = arith.constant 0 : i32
    return %arg0, %c0_i32, %c0_i32_0 : i32, i32, i32
  }
  func.func @transform_5(%arg0: i32) -> (i32, i32, i32) {
    %c0_i32 = arith.constant 0 : i32
    %c0_i32_0 = arith.constant 0 : i32
    %c0_i32_1 = arith.constant 0 : i32
    return %arg0, %c0_i32, %c0_i32_0 : i32, i32, i32
  }
  func.func @transform_6(%arg0: i32) -> (i32, i32, i32) {
    %c0_i32 = arith.constant 0 : i32
    %c0_i32_0 = arith.constant 0 : i32
    %c0_i32_1 = arith.constant 0 : i32
    return %arg0, %c0_i32, %c0_i32_0 : i32, i32, i32
  }
  func.func @transform_7(%arg0: i32) -> (i32, i32, i32) {
    %c0_i32 = arith.constant 0 : i32
    %c0_i32_0 = arith.constant 0 : i32
    %c0_i32_1 = arith.constant 0 : i32
    return %arg0, %c0_i32, %c0_i32_0 : i32, i32, i32
  }
  func.func @transform_8(%arg0: i32) -> (i32, i32, i32) {
    %c0_i32 = arith.constant 0 : i32
    %c0_i32_0 = arith.constant 0 : i32
    %c0_i32_1 = arith.constant 0 : i32
    return %arg0, %c0_i32, %c0_i32_0 : i32, i32, i32
  }
  func.func @transform_9(%arg0: i32) -> (i32, i32, i32) {
    %c0_i32 = arith.constant 0 : i32
    %c0_i32_0 = arith.constant 0 : i32
    %c0_i32_1 = arith.constant 0 : i32
    return %arg0, %c0_i32, %c0_i32_0 : i32, i32, i32
  }
  func.func @transform_10(%arg0: i32) -> (i32, i32, i32) {
    %c0_i32 = arith.constant 0 : i32
    %c0_i32_0 = arith.constant 0 : i32
    %c0_i32_1 = arith.constant 0 : i32
    %c0_i32_2 = arith.constant 0 : i32
    return %c0_i32, %c0_i32_0, %c0_i32_1 : i32, i32, i32
  }
}

</mosaic_0001>

<llo_original>
// kernel: tpu_custom_call.1
$region0: #{tpu_custom_call.1}
  #allocation0 [shape = 'u32[]', space=smem, size = 0x4, offset = 0x4, fixed_abs, tag = 'smem constant byte address 0x4 - core index']
  #allocation1 [shape = 'u32[72,128]{1,0:T(1,128)}', space=vmem, size = 0x9000, scoped, tag = 'internal scratch']
  #allocation2 [shape = 'f32[16,32]{1,0:T(8,128)}', space=vmem, size = 0x2000, scoped, tag = 'scratch operand']
  %s0 = inlined_call_operand.hbm [shape: f32[2,8,32], index: 0, kind: input, shape index: {}, may-alias: {0,10}]
  %s1 = inlined_call_operand.vmem [shape: f32[8,8], index: 1, kind: input, shape index: {}]
  %s2 = inlined_call_operand.vmem [shape: f32[8,8], index: 2, kind: input, shape index: {}]
  %s3 = inlined_call_operand.vmem [shape: f32[2,10,128], index: 3, kind: input, shape index: {}]
  %s4 = inlined_call_operand.vmem [shape: bf16[2,32,32], index: 4, kind: input, shape index: {}]
  %s5 = inlined_call_operand.vmem [shape: bf16[2,32,32], index: 5, kind: input, shape index: {}]
  %s6 = inlined_call_operand.vmem [shape: bf16[2,32,32], index: 6, kind: input, shape index: {}]
  %s7 = inlined_call_operand.vmem [shape: bf16[2,32,32], index: 7, kind: input, shape index: {}]
  %s8 = inlined_call_operand.vmem [shape: bf16[2,32,128], index: 8, kind: input, shape index: {}]
  %s9 = inlined_call_operand.vmem [shape: bf16[2,128,32], index: 9, kind: input, shape index: {}]
  %s10 = inlined_call_operand.hbm [shape: f32[2,8,32], index: 10, kind: output, shape index: {}, may-alias: {0,10}]
  %s11 = sld [smem:[#allocation0]]
  $region85: #{tpu_custom_call.1} parent=0
    _
  %s13 = ssub.s32 1, %s11
  %s14 = scalar_select 0, %s13, %s11
  $region1: #{tpu_custom_call.1} parent=0
    #allocation3 [shape = 'u8[8192]{0}', space=vmem, size = 0x2000, scoped, tag = 'input window, operand 0, single buffered']
    #allocation4 [shape = 's32[2]{0}', space=sflag, size = 0x8, scoped, tag = 'scoped memory for tpu_custom_call.1']
    #allocation5 [shape = 's32[2]{0}', space=sflag, size = 0x8, scoped, tag = 'scoped memory for tpu_custom_call.1']
    #allocation6 [shape = 'u8[8192]{0}', space=vmem, size = 0x2000, scoped, tag = 'output window, operand 0, single buffered']
    %15 = vsyncpa [#allocation4], 0
    %16 = vsyncpa [#allocation5], 0
    loop: start=0, step=1, limit=4
    $region2: #{tpu_custom_call.1} parent=1 // loop_pre_header
      _
    $region3: #{tpu_custom_call.1} parent=1 // loop_header
      %s18 = sphi 0, %s22
      %p19 = scmp.ge.s32.totalorder %s18, 4
      %s26 = sphi 0, %s26
      %s28 = sphi 0, %s26
      %s29 = sphi 0, %s28
      %s43 = sphi 0, %s29
      %s47 = sphi 0, %s47
      %s49 = sphi 0, %s47
      %s50 = sphi 0, %s49
      %s64 = sphi 0, %s50
      %s68 = sphi 0, %s68
      %s70 = sphi 0, %s68
      %s71 = sphi 0, %s70
      %s85 = sphi 0, %s71
      %s91 = sphi 0, %s93
      %s94 = sphi 0, %s91
      %s95 = sphi 0, %s94
      %s111 = sphi 0, %s95
      %s117 = sphi 0, %s119
      %s120 = sphi 0, %s117
      %s121 = sphi 0, %s120
      %s137 = sphi 0, %s121
      %s143 = sphi 0, %s145
      %s146 = sphi 0, %s143
      %s147 = sphi 0, %s146
      %s163 = sphi 0, %s147
      %s169 = sphi 0, %s171
      %s172 = sphi 0, %s169
      %s173 = sphi 0, %s172
      %s189 = sphi 0, %s173
      %s195 = sphi 0, %s197
      %s198 = sphi 0, %s195
      %s199 = sphi 0, %s198
      %s215 = sphi 0, %s199
      %s221 = sphi 0, %s223
      %s224 = sphi 0, %s221
      %s225 = sphi 0, %s224
      %s241 = sphi 0, %s225
      %s247 = sphi 0, %s249
      %s250 = sphi 0, %s247
      %s251 = sphi 0, %s250
      %s267 = sphi 0, %s251
      %s271 = sphi 0, %s271
      %s273 = sphi 0, %s271
      %s274 = sphi 0, %s273
      %s288 = sphi 0, %s274
    $region4: #{tpu_custom_call.1} parent=1 // loop_header_branch
      %21 = sbr.rel (%p19) target = $region8
    $region5: #{tpu_custom_call.1} parent=1 // loop_body
      %s23 = ssub.s32 %s18, 1
      %s24 = ssub.s32 %s18, 2
      %s25 = sadd.s32 %s18, 1
      %s27 = sadd.s32 %s26, 1
      %p30 = scmp.eq.s32.totalorder %s18, 1
      %p31 = scmp.ne.s32.totalorder %s26, %s28
      %p32 = scmp.eq.s32.totalorder %s18, 0
      %p33 = por %p31, %p32
      %p34 = scmp.ne.s32.totalorder %s26, %s28
      %p35 = scmp.eq.s32.totalorder %s23, 1
      %p36 = por %p34, %p35
      %p37 = scmp.ne.s32.totalorder %s28, %s29
      %p38 = scmp.eq.s32.totalorder %s23, 0
      %p39 = por %p37, %p38
      %p40 = scmp.ne.s32.totalorder %s28, %s29
      %p41 = scmp.eq.s32.totalorder %s24, 1
      %p42 = por %p40, %p41
      %p44 = scmp.ne.s32.totalorder %s29, %s43
      %p45 = scmp.eq.s32.totalorder %s24, 0
      %p46 = por %p44, %p45
      %s48 = sadd.s32 %s47, 1
      %p51 = scmp.eq.s32.totalorder %s18, 1
      %p52 = scmp.ne.s32.totalorder %s47, %s49
      %p53 = scmp.eq.s32.totalorder %s18, 0
      %p54 = por %p52, %p53
      %p55 = scmp.ne.s32.totalorder %s47, %s49
      %p56 = scmp.eq.s32.totalorder %s23, 1
      %p57 = por %p55, %p56
      %p58 = scmp.ne.s32.totalorder %s49, %s50
      %p59 = scmp.eq.s32.totalorder %s23, 0
      %p60 = por %p58, %p59
      %p61 = scmp.ne.s32.totalorder %s49, %s50
      %p62 = scmp.eq.s32.totalorder %s24, 1
      %p63 = por %p61, %p62
      %p65 = scmp.ne.s32.totalorder %s50, %s64
      %p66 = scmp.eq.s32.totalorder %s24, 0
      %p67 = por %p65, %p66
      %s69 = sadd.s32 %s68, 1
      %p72 = scmp.eq.s32.totalorder %s18, 1
      %p73 = scmp.ne.s32.totalorder %s68, %s70
      %p74 = scmp.eq.s32.totalorder %s18, 0
      %p75 = por %p73, %p74
      %p76 = scmp.ne.s32.totalorder %s68, %s70
      %p77 = scmp.eq.s32.totalorder %s23, 1
      %p78 = por %p76, %p77
      %p79 = scmp.ne.s32.totalorder %s70, %s71
      %p80 = scmp.eq.s32.totalorder %s23, 0
      %p81 = por %p79, %p80
      %p82 = scmp.ne.s32.totalorder %s70, %s71
      %p83 = scmp.eq.s32.totalorder %s24, 1
      %p84 = por %p82, %p83
      %p86 = scmp.ne.s32.totalorder %s71, %s85
      %p87 = scmp.eq.s32.totalorder %s24, 0
      %p88 = por %p86, %p87
      %s89 = ssub.s32 %s18, %s25
      %p90 = scmp.eq.s32.totalorder %s89, 0
      %s92 = sadd.s32 %s91, 1
      %s93 = scalar_select %p90, %s91, %s92
      %p96 = pneg %p90
      %p97 = scmp.eq.s32.totalorder %s18, 1
      %p98 = por %p96, %p97
      %p99 = scmp.ne.s32.totalorder %s91, %s94
      %p100 = scmp.eq.s32.totalorder %s18, 0
      %p101 = por %p99, %p100
      %p102 = scmp.ne.s32.totalorder %s91, %s94
      %p103 = scmp.eq.s32.totalorder %s23, 1
      %p104 = por %p102, %p103
      %p105 = scmp.ne.s32.totalorder %s94, %s95
      %p106 = scmp.eq.s32.totalorder %s23, 0
      %p107 = por %p105, %p106
      %p108 = scmp.ne.s32.totalorder %s94, %s95
      %p109 = scmp.eq.s32.totalorder %s24, 1
      %p110 = por %p108, %p109
      %p112 = scmp.ne.s32.totalorder %s95, %s111
      %p113 = scmp.eq.s32.totalorder %s24, 0
      %p114 = por %p112, %p113
      %s115 = ssub.s32 %s18, %s25
      %p116 = scmp.eq.s32.totalorder %s115, 0
      %s118 = sadd.s32 %s117, 1
      %s119 = scalar_select %p116, %s117, %s118
      %p122 = pneg %p116
      %p123 = scmp.eq.s32.totalorder %s18, 1
      %p124 = por %p122, %p123
      %p125 = scmp.ne.s32.totalorder %s117, %s120
      %p126 = scmp.eq.s32.totalorder %s18, 0
      %p127 = por %p125, %p126
      %p128 = scmp.ne.s32.totalorder %s117, %s120
      %p129 = scmp.eq.s32.totalorder %s23, 1
      %p130 = por %p128, %p129
      %p131 = scmp.ne.s32.totalorder %s120, %s121
      %p132 = scmp.eq.s32.totalorder %s23, 0
      %p133 = por %p131, %p132
      %p134 = scmp.ne.s32.totalorder %s120, %s121
      %p135 = scmp.eq.s32.totalorder %s24, 1
      %p136 = por %p134, %p135
      %p138 = scmp.ne.s32.totalorder %s121, %s137
      %p139 = scmp.eq.s32.totalorder %s24, 0
      %p140 = por %p138, %p139
      %s141 = ssub.s32 %s18, %s25
      %p142 = scmp.eq.s32.totalorder %s141, 0
      %s144 = sadd.s32 %s143, 1
      %s145 = scalar_select %p142, %s143, %s144
      %p148 = pneg %p142
      %p149 = scmp.eq.s32.totalorder %s18, 1
      %p150 = por %p148, %p149
      %p151 = scmp.ne.s32.totalorder %s143, %s146
      %p152 = scmp.eq.s32.totalorder %s18, 0
      %p153 = por %p151, %p152
      %p154 = scmp.ne.s32.totalorder %s143, %s146
      %p155 = scmp.eq.s32.totalorder %s23, 1
      %p156 = por %p154, %p155
      %p157 = scmp.ne.s32.totalorder %s146, %s147
      %p158 = scmp.eq.s32.totalorder %s23, 0
      %p159 = por %p157, %p158
      %p160 = scmp.ne.s32.totalorder %s146, %s147
      %p161 = scmp.eq.s32.totalorder %s24, 1
      %p162 = por %p160, %p161
      %p164 = scmp.ne.s32.totalorder %s147, %s163
      %p165 = scmp.eq.s32.totalorder %s24, 0
      %p166 = por %p164, %p165
      %s167 = ssub.s32 %s18, %s25
      %p168 = scmp.eq.s32.totalorder %s167, 0
      %s170 = sadd.s32 %s169, 1
      %s171 = scalar_select %p168, %s169, %s170
      %p174 = pneg %p168
      %p175 = scmp.eq.s32.totalorder %s18, 1
      %p176 = por %p174, %p175
      %p177 = scmp.ne.s32.totalorder %s169, %s172
      %p178 = scmp.eq.s32.totalorder %s18, 0
      %p179 = por %p177, %p178
      %p180 = scmp.ne.s32.totalorder %s169, %s172
      %p181 = scmp.eq.s32.totalorder %s23, 1
      %p182 = por %p180, %p181
      %p183 = scmp.ne.s32.totalorder %s172, %s173
      %p184 = scmp.eq.s32.totalorder %s23, 0
      %p185 = por %p183, %p184
      %p186 = scmp.ne.s32.totalorder %s172, %s173
      %p187 = scmp.eq.s32.totalorder %s24, 1
      %p188 = por %p186, %p187
      %p190 = scmp.ne.s32.totalorder %s173, %s189
      %p191 = scmp.eq.s32.totalorder %s24, 0
      %p192 = por %p190, %p191
      %s193 = ssub.s32 %s18, %s25
      %p194 = scmp.eq.s32.totalorder %s193, 0
      %s196 = sadd.s32 %s195, 1
      %s197 = scalar_select %p194, %s195, %s196
      %p200 = pneg %p194
      %p201 = scmp.eq.s32.totalorder %s18, 1
      %p202 = por %p200, %p201
      %p203 = scmp.ne.s32.totalorder %s195, %s198
      %p204 = scmp.eq.s32.totalorder %s18, 0
      %p205 = por %p203, %p204
      %p206 = scmp.ne.s32.totalorder %s195, %s198
      %p207 = scmp.eq.s32.totalorder %s23, 1
      %p208 = por %p206, %p207
      %p209 = scmp.ne.s32.totalorder %s198, %s199
      %p210 = scmp.eq.s32.totalorder %s23, 0
      %p211 = por %p209, %p210
      %p212 = scmp.ne.s32.totalorder %s198, %s199
      %p213 = scmp.eq.s32.totalorder %s24, 1
      %p214 = por %p212, %p213
      %p216 = scmp.ne.s32.totalorder %s199, %s215
      %p217 = scmp.eq.s32.totalorder %s24, 0
      %p218 = por %p216, %p217
      %s219 = ssub.s32 %s18, %s25
      %p220 = scmp.eq.s32.totalorder %s219, 0
      %s222 = sadd.s32 %s221, 1
      %s223 = scalar_select %p220, %s221, %s222
      %p226 = pneg %p220
      %p227 = scmp.eq.s32.totalorder %s18, 1
      %p228 = por %p226, %p227
      %p229 = scmp.ne.s32.totalorder %s221, %s224
      %p230 = scmp.eq.s32.totalorder %s18, 0
      %p231 = por %p229, %p230
      %p232 = scmp.ne.s32.totalorder %s221, %s224
      %p233 = scmp.eq.s32.totalorder %s23, 1
      %p234 = por %p232, %p233
      %p235 = scmp.ne.s32.totalorder %s224, %s225
      %p236 = scmp.eq.s32.totalorder %s23, 0
      %p237 = por %p235, %p236
      %p238 = scmp.ne.s32.totalorder %s224, %s225
      %p239 = scmp.eq.s32.totalorder %s24, 1
      %p240 = por %p238, %p239
      %p242 = scmp.ne.s32.totalorder %s225, %s241
      %p243 = scmp.eq.s32.totalorder %s24, 0
      %p244 = por %p242, %p243
      %s245 = ssub.s32 %s18, %s25
      %p246 = scmp.eq.s32.totalorder %s245, 0
      %s248 = sadd.s32 %s247, 1
      %s249 = scalar_select %p246, %s247, %s248
      %p252 = pneg %p246
      %p253 = scmp.eq.s32.totalorder %s18, 1
      %p254 = por %p252, %p253
      %p255 = scmp.ne.s32.totalorder %s247, %s250
      %p256 = scmp.eq.s32.totalorder %s18, 0
      %p257 = por %p255, %p256
      %p258 = scmp.ne.s32.totalorder %s247, %s250
      %p259 = scmp.eq.s32.totalorder %s23, 1
      %p260 = por %p258, %p259
      %p261 = scmp.ne.s32.totalorder %s250, %s251
      %p262 = scmp.eq.s32.totalorder %s23, 0
      %p263 = por %p261, %p262
      %p264 = scmp.ne.s32.totalorder %s250, %s251
      %p265 = scmp.eq.s32.totalorder %s24, 1
      %p266 = por %p264, %p265
      %p268 = scmp.ne.s32.totalorder %s251, %s267
      %p269 = scmp.eq.s32.totalorder %s24, 0
      %p270 = por %p268, %p269
      %s272 = sadd.s32 %s271, 1
      %p275 = scmp.eq.s32.totalorder %s18, 1
      %p276 = scmp.ne.s32.totalorder %s271, %s273
      %p277 = scmp.eq.s32.totalorder %s18, 0
      %p278 = por %p276, %p277
      %p279 = scmp.ne.s32.totalorder %s271, %s273
      %p280 = scmp.eq.s32.totalorder %s23, 1
      %p281 = por %p279, %p280
      %p282 = scmp.ne.s32.totalorder %s273, %s274
      %p283 = scmp.eq.s32.totalorder %s23, 0
      %p284 = por %p282, %p283
      %p285 = scmp.ne.s32.totalorder %s273, %s274
      %p286 = scmp.eq.s32.totalorder %s24, 1
      %p287 = por %p285, %p286
      %p289 = scmp.ne.s32.totalorder %s274, %s288
      %p290 = scmp.eq.s32.totalorder %s24, 0
      %p291 = por %p289, %p290
      %p292 = scmp.le.s32.totalorder 1, %s18
      %p293 = scmp.lt.s32.totalorder %s18, 3
      %p294 = pnand %p292, %p293
      %p295 = pneg %p294
      // Predicated region
      $region9: #{tpu_custom_call.1} parent=5 // pred_check
        _
      $region10: #{tpu_custom_call.1} parent=5 // pred_check_branch
        %297 = sbr.rel (%p294) target = $region12
      $region11: #{tpu_custom_call.1} parent=5 // pred_region
        %s298 = ssub.s32 %s18, 1
        // Predicated region
        $region13: #{tpu_custom_call.1} parent=11 // pred_check
          %p299 = pneg %p39
        $region14: #{tpu_custom_call.1} parent=11 // pred_check_branch
          %301 = sbr.rel (%p299) target = $region16
        $region15: #{tpu_custom_call.1} parent=11 // pred_region
          %303 = vsyncadd [#allocation4], 0
          %s304 = sshll.u32 %s0, 4
          %s305 = int_to_ptr.hbm [resolvable:$true] %s304
          %s306 = sshll.u32 [#allocation3], 4
          %s307 = int_to_ptr.vmem [resolvable:$true] %s306
          %312 = dma.hbm_to_vmem [thread:$0]  %s305, 256, %s307, [#allocation4], 128, 128, 8
        $region16: #{tpu_custom_call.1} parent=11 // pred_fallthru
          _
        // Predicated region
        $region17: #{tpu_custom_call.1} parent=11 // pred_check
          %p313 = pneg %p60
        $region18: #{tpu_custom_call.1} parent=11 // pred_check_branch
          %315 = sbr.rel (%p313) target = $region20
        $region19: #{tpu_custom_call.1} parent=11 // pred_region
          _
        $region20: #{tpu_custom_call.1} parent=11 // pred_fallthru
          _
        // Predicated region
        $region21: #{tpu_custom_call.1} parent=11 // pred_check
          %p316 = pneg %p81
        $region22: #{tpu_custom_call.1} parent=11 // pred_check_branch
          %318 = sbr.rel (%p316) target = $region24
        $region23: #{tpu_custom_call.1} parent=11 // pred_region
          _
        $region24: #{tpu_custom_call.1} parent=11 // pred_fallthru
          _
      $region12: #{tpu_custom_call.1} parent=5 // pred_fallthru
        _
      %p319 = scmp.lt.s32.totalorder %s18, 2
      // Predicated region
      $region25: #{tpu_custom_call.1} parent=5 // pred_check
        %p320 = pneg %p319
      $region26: #{tpu_custom_call.1} parent=5 // pred_check_branch
        %322 = sbr.rel (%p320) target = $region28
      $region27: #{tpu_custom_call.1} parent=5 // pred_region
        // Predicated region
        $region29: #{tpu_custom_call.1} parent=27 // pred_check
          %p323 = pneg %p101
        $region30: #{tpu_custom_call.1} parent=27 // pred_check_branch
          %325 = sbr.rel (%p323) target = $region32
        $region31: #{tpu_custom_call.1} parent=27 // pred_region
          %p326 = scmp.lt.s32.totalorder %s18, 1
          %s327 = scalar_select %p326, %s18, 1
          %s328 = smul.addr %s327, 2
          %s329 = smul.addr %s328, 8
          %s330 = scalar_lea.vmem %s3, %s329
        $region32: #{tpu_custom_call.1} parent=27 // pred_fallthru
          _
        // Predicated region
        $region33: #{tpu_custom_call.1} parent=27 // pred_check
          %p331 = pneg %p127
        $region34: #{tpu_custom_call.1} parent=27 // pred_check_branch
          %333 = sbr.rel (%p331) target = $region36
        $region35: #{tpu_custom_call.1} parent=27 // pred_region
          %p334 = scmp.lt.s32.totalorder %s18, 1
          %s335 = scalar_select %p334, %s18, 1
          %s336 = smul.addr %s335, 4
          %s337 = smul.addr %s336, 4
          %s338 = scalar_lea.vmem %s4, %s337
        $region36: #{tpu_custom_call.1} parent=27 // pred_fallthru
          _
        // Predicated region
        $region37: #{tpu_custom_call.1} parent=27 // pred_check
          %p339 = pneg %p153
        $region38: #{tpu_custom_call.1} parent=27 // pred_check_branch
          %341 = sbr.rel (%p339) target = $region40
        $region39: #{tpu_custom_call.1} parent=27 // pred_region
          %p342 = scmp.lt.s32.totalorder %s18, 1
          %s343 = scalar_select %p342, %s18, 1
          %s344 = smul.addr %s343, 4
          %s345 = smul.addr %s344, 4
          %s346 = scalar_lea.vmem %s5, %s345
        $region40: #{tpu_custom_call.1} parent=27 // pred_fallthru
          _
        // Predicated region
        $region41: #{tpu_custom_call.1} parent=27 // pred_check
          %p347 = pneg %p179
        $region42: #{tpu_custom_call.1} parent=27 // pred_check_branch
          %349 = sbr.rel (%p347) target = $region44
        $region43: #{tpu_custom_call.1} parent=27 // pred_region
          %p350 = scmp.lt.s32.totalorder %s18, 1
          %s351 = scalar_select %p350, %s18, 1
          %s352 = smul.addr %s351, 4
          %s353 = smul.addr %s352, 4
          %s354 = scalar_lea.vmem %s6, %s353
        $region44: #{tpu_custom_call.1} parent=27 // pred_fallthru
          _
        // Predicated region
        $region45: #{tpu_custom_call.1} parent=27 // pred_check
          %p355 = pneg %p205
        $region46: #{tpu_custom_call.1} parent=27 // pred_check_branch
          %357 = sbr.rel (%p355) target = $region48
        $region47: #{tpu_custom_call.1} parent=27 // pred_region
          %p358 = scmp.lt.s32.totalorder %s18, 1
          %s359 = scalar_select %p358, %s18, 1
          %s360 = smul.addr %s359, 4
          %s361 = smul.addr %s360, 4
          %s362 = scalar_lea.vmem %s7, %s361
        $region48: #{tpu_custom_call.1} parent=27 // pred_fallthru
          _
        // Predicated region
        $region49: #{tpu_custom_call.1} parent=27 // pred_check
          %p363 = pneg %p231
        $region50: #{tpu_custom_call.1} parent=27 // pred_check_branch
          %365 = sbr.rel (%p363) target = $region52
        $region51: #{tpu_custom_call.1} parent=27 // pred_region
          %p366 = scmp.lt.s32.totalorder %s18, 1
          %s367 = scalar_select %p366, %s18, 1
          %s368 = smul.addr %s367, 4
          %s369 = smul.addr %s368, 4
          %s370 = scalar_lea.vmem %s8, %s369
        $region52: #{tpu_custom_call.1} parent=27 // pred_fallthru
          _
        // Predicated region
        $region53: #{tpu_custom_call.1} parent=27 // pred_check
          %p371 = pneg %p257
        $region54: #{tpu_custom_call.1} parent=27 // pred_check_branch
          %373 = sbr.rel (%p371) target = $region56
        $region55: #{tpu_custom_call.1} parent=27 // pred_region
          %p374 = scmp.lt.s32.totalorder %s18, 1
          %s375 = scalar_select %p374, %s18, 1
          %s376 = smul.addr %s375, 16
          %s377 = smul.addr %s376, 4
          %s378 = scalar_lea.vmem %s9, %s377
        $region56: #{tpu_custom_call.1} parent=27 // pred_fallthru
          _
      $region28: #{tpu_custom_call.1} parent=5 // pred_fallthru
        _
      %p379 = scmp.le.s32.totalorder 1, %s18
      %p380 = scmp.lt.s32.totalorder %s18, 3
      %p381 = pnand %p379, %p380
      %p382 = pneg %p381
      // Predicated region
      $region57: #{tpu_custom_call.1} parent=5 // pred_check
        _
      $region58: #{tpu_custom_call.1} parent=5 // pred_check_branch
        %384 = sbr.rel (%p381) target = $region60
      $region59: #{tpu_custom_call.1} parent=5 // pred_region
        %s385 = ssub.s32 %s18, 1
        // Predicated region
        $region61: #{tpu_custom_call.1} parent=59 // pred_check
          %p386 = pneg %p39
        $region62: #{tpu_custom_call.1} parent=59 // pred_check_branch
          %388 = sbr.rel (%p386) target = $region64
        $region63: #{tpu_custom_call.1} parent=59 // pred_region
          %390 = dma.done [#allocation4], 256
        $region64: #{tpu_custom_call.1} parent=59 // pred_fallthru
          _
        %p391 = pneg %p39
        %p392 = pneg %p36
        %p393 = pneg %p60
        %p394 = pneg %p57
        %p395 = pneg %p81
        %p396 = pneg %p78
        %p397 = scmp.lt.s32.totalorder %s23, 1
        %s398 = scalar_select %p397, %s23, 1
        %s399 = smul.addr %s398, 2
        %s400 = smul.addr %s399, 8
        %s401 = scalar_lea.vmem %s3, %s400
        %p402 = pneg %p107
        %p403 = pneg %p104
        %p404 = scmp.lt.s32.totalorder %s23, 1
        %s405 = scalar_select %p404, %s23, 1
        %s406 = smul.addr %s405, 4
        %s407 = smul.addr %s406, 4
        %s408 = scalar_lea.vmem %s4, %s407
        %p409 = pneg %p133
        %p410 = pneg %p130
        %p411 = scmp.lt.s32.totalorder %s23, 1
        %s412 = scalar_select %p411, %s23, 1
        %s413 = smul.addr %s412, 4
        %s414 = smul.addr %s413, 4
        %s415 = scalar_lea.vmem %s5, %s414
        %p416 = pneg %p159
        %p417 = pneg %p156
        %p418 = scmp.lt.s32.totalorder %s23, 1
        %s419 = scalar_select %p418, %s23, 1
        %s420 = smul.addr %s419, 4
        %s421 = smul.addr %s420, 4
        %s422 = scalar_lea.vmem %s6, %s421
        %p423 = pneg %p185
        %p424 = pneg %p182
        %p425 = scmp.lt.s32.totalorder %s23, 1
        %s426 = scalar_select %p425, %s23, 1
        %s427 = smul.addr %s426, 4
        %s428 = smul.addr %s427, 4
        %s429 = scalar_lea.vmem %s7, %s428
        %p430 = pneg %p211
        %p431 = pneg %p208
        %p432 = scmp.lt.s32.totalorder %s23, 1
        %s433 = scalar_select %p432, %s23, 1
        %s434 = smul.addr %s433, 4
        %s435 = smul.addr %s434, 4
        %s436 = scalar_lea.vmem %s8, %s435
        %p437 = pneg %p237
        %p438 = pneg %p234
        %p439 = scmp.lt.s32.totalorder %s23, 1
        %s440 = scalar_select %p439, %s23, 1
        %s441 = smul.addr %s440, 16
        %s442 = smul.addr %s441, 4
        %s443 = scalar_lea.vmem %s9, %s442
        %p444 = pneg %p263
        %p445 = pneg %p260
        %p446 = pneg %p284
        %p447 = pneg %p281
        %p448 = scmp.lt.s32.totalorder %s23, 1
        %s449 = scalar_select %p448, %s23, 1
        %s450 = smul.addr %s449, 2
        %s451 = smul.addr %s450, 8
        %s452 = scalar_lea.vmem %s3, %s451
        %p453 = scmp.lt.s32.totalorder %s23, 1
        %s454 = scalar_select %p453, %s23, 1
        %s455 = smul.addr %s454, 4
        %s456 = smul.addr %s455, 4
        %s457 = scalar_lea.vmem %s4, %s456
        %p458 = scmp.lt.s32.totalorder %s23, 1
        %s459 = scalar_select %p458, %s23, 1
        %s460 = smul.addr %s459, 4
        %s461 = smul.addr %s460, 4
        %s462 = scalar_lea.vmem %s5, %s461
        %p463 = scmp.lt.s32.totalorder %s23, 1
        %s464 = scalar_select %p463, %s23, 1
        %s465 = smul.addr %s464, 4
        %s466 = smul.addr %s465, 4
        %s467 = scalar_lea.vmem %s6, %s466
        %p468 = scmp.lt.s32.totalorder %s23, 1
        %s469 = scalar_select %p468, %s23, 1
        %s470 = smul.addr %s469, 4
        %s471 = smul.addr %s470, 4
        %s472 = scalar_lea.vmem %s7, %s471
        %p473 = scmp.lt.s32.totalorder %s23, 1
        %s474 = scalar_select %p473, %s23, 1
        %s475 = smul.addr %s474, 4
        %s476 = smul.addr %s475, 4
        %s477 = scalar_lea.vmem %s8, %s476
        %p478 = scmp.lt.s32.totalorder %s23, 1
        %s479 = scalar_select %p478, %s23, 1
        %s480 = smul.addr %s479, 16
        %s481 = smul.addr %s480, 4
        %s482 = scalar_lea.vmem %s9, %s481
        %p484 = scmp.eq.s32.totalorder %s23, 0
        // Predicated region
        $region65: #{tpu_custom_call.1} parent=59 // pred_check
          %p485 = pneg %p484
        $region66: #{tpu_custom_call.1} parent=59 // pred_check_branch
          %487 = sbr.rel (%p485) target = $region68
        $region67: #{tpu_custom_call.1} parent=59 // pred_region
          %v488 = vld [vmem:[#allocation3] sm:$0xff]
          %v489 = vld [vmem:[#allocation3 + $0x8] sm:$0xff]
          %vm490 = vcmask 261120
          %491 = vst.msk [vmem:[#allocation2] sm:$0xff] %vm490, %v488
          %492 = vst.msk [vmem:[#allocation2 + $0x8] sm:$0xff] %vm490, %v489
        $region68: #{tpu_custom_call.1} parent=59 // pred_fallthru
          _
        %v493 = vld [vmem:[%s452] sm:$0xff]
        %v494 = vld [vmem:[%s452 + $0x8] sm:$0x3]
        %v495 = vld [vmem:[#allocation2] sm:$0xff]
        %v496 = vld [vmem:[#allocation2 + $0x8] sm:$0xff]
        %vm497 = vcmask 261120
        %v498 = vsel %vm497, %v495, 0.0
        %499 = vadd.xlane.f32.xlu0 %v498
        %v500 = vpop.xlane.xlu0 %499
        %v501 = vsel %vm497, %v496, 0.0
        %502 = vadd.xlane.f32.xlu0 %v501
        %v503 = vpop.xlane.xlu0 %502
        %v504 = vrcp.pop 32.0
        %v505 = vmul.f32 32.0, %v504
        %v506 = vsub.f32 1.0, %v505
        %v507 = vmul.f32 %v504, %v506
        %v508 = vadd.f32 %v504, %v507
        %vm509 = vweird.f32 %v504
        %v510 = vsel %vm509, %v504, %v508
        %v511 = vmul.f32 %v500, %v510
        %v512 = vmul.f32 %v503, %v510
        %v513 = vsub.f32 %v495, %v511
        %v514 = vsub.f32 %v496, %v512
        %v515 = vmul.f32 %v513, %v513
        %v516 = vmul.f32 %v514, %v514
        %v517 = vsel %vm497, %v515, 0.0
        %518 = vadd.xlane.f32.xlu0 %v517
        %v519 = vpop.xlane.xlu0 %518
        %v520 = vsel %vm497, %v516, 0.0
        %521 = vadd.xlane.f32.xlu0 %v520
        %v522 = vpop.xlane.xlu0 %521
        %v523 = vmul.f32 %v519, %v510
        %v524 = vmul.f32 %v522, %v510
        %v525 = vadd.f32 %v523, 1e-05
        %v526 = vadd.f32 %v524, 1e-05
        %v527 = vrsqrt.pop %v525
        %v528 = vmul.f32 %v527, %v525
        %v529 = vmul.f32 %v528, %v527
        %v530 = vmul.f32 0.5, %v529
        %v531 = vsub.f32 1.5, %v530
        %v532 = vmul.f32 %v527, %v531
        %vm533 = vweird.f32 %v525
        %vm534 = vweird.f32 %v527
        %vm535 = vmor %vm533, %vm534
        %v536 = vsel %vm535, %v527, %v532
        %v537 = vrsqrt.pop %v526
        %v538 = vmul.f32 %v537, %v526
        %v539 = vmul.f32 %v538, %v537
        %v540 = vmul.f32 0.5, %v539
        %v541 = vsub.f32 1.5, %v540
        %v542 = vmul.f32 %v537, %v541
        %vm543 = vweird.f32 %v526
        %vm544 = vweird.f32 %v537
        %vm545 = vmor %vm543, %vm544
        %v546 = vsel %vm545, %v537, %v542
        %v547 = vmul.f32 %v513, %v536
        %v548 = vmul.f32 %v514, %v546
        %v549 = vperm.slane %v493, 0
        %v550 = vmul.f32 %v547, %v549
        %v551 = vmul.f32 %v548, %v549
        %v552 = vperm.slane %v493, 1
        %v553 = vadd.f32 %v550, %v552
        %v554 = vadd.f32 %v551, %v552
        %v555 = vpack.c.bf16 %v554, %v553
        %v556 = vld [vmem:[%s457] sm:$0xf]
        %v557 = vld [vmem:[%s457 + $0x4] sm:$0xf]
        %v558 = vld [vmem:[%s457 + $0x8] sm:$0xf]
        %v559 = vld [vmem:[%s457 + $0xc] sm:$0xf]
        %v560 = vperm.slane %v493, 2
        %v565 = vunpack.c.l.b16 %v556
        %v566 = vunpack.c.l.b16 %v557
        %v567 = vunpack.c.l.b16 %v558
        %v568 = vunpack.c.l.b16 %v559
        %v569 = vpack.c.b16 %v566, %v565
        %v570 = vpack.c.b16 %v568, %v567
        %v574 = vsel %vm497, %v555, 0
        %576 = vmatpush.bf16.msra.mxu0 0
        %577 = vmatpush.bf16.msra.mxu0 0
        %578 = vmatpush.bf16.msra.mxu0 0
        %579 = vmatpush.bf16.msra.mxu0 0
        %580 = vmatpush.bf16.msra.mxu0 0
        %581 = vmatpush.bf16.msra.mxu0 0
        %582 = vmatpush.bf16.msra.mxu0 %v570
        %583 = vmatpush.bf16.msra.mxu0 %v569
        %584 = vmatmul.bf16.gmra.mxu0 %v574
        %v585 = vpop.f32.mrf.mxu0
        %v586 = vadd.f32 %v560, %v585
        %v587 = vpop.f32.mrf.mxu0
        %v588 = vadd.f32 %v560, %v587
        %589 = vdwg.mxu0
        %v590 = vld [vmem:[%s462] sm:$0xf]
        %v591 = vld [vmem:[%s462 + $0x4] sm:$0xf]
        %v592 = vld [vmem:[%s462 + $0x8] sm:$0xf]
        %v593 = vld [vmem:[%s462 + $0xc] sm:$0xf]
        %v594 = vperm.slane %v493, 3
        %v599 = vunpack.c.l.b16 %v590
        %v600 = vunpack.c.l.b16 %v591
        %v601 = vunpack.c.l.b16 %v592
        %v602 = vunpack.c.l.b16 %v593
        %v603 = vpack.c.b16 %v600, %v599
        %v604 = vpack.c.b16 %v602, %v601
        %607 = vmatpush.bf16.msra.mxu0 0
        %608 = vmatpush.bf16.msra.mxu0 0
        %609 = vmatpush.bf16.msra.mxu0 0
        %610 = vmatpush.bf16.msra.mxu0 0
        %611 = vmatpush.bf16.msra.mxu0 0
        %612 = vmatpush.bf16.msra.mxu0 0
        %613 = vmatpush.bf16.msra.mxu0 %v604
        %614 = vmatpush.bf16.msra.mxu0 %v603
        %615 = vmatmul.bf16.gmra.mxu0 %v574
        %v616 = vpop.f32.mrf.mxu0
        %v617 = vadd.f32 %v594, %v616
        %v618 = vpop.f32.mrf.mxu0
        %v619 = vadd.f32 %v594, %v618
        %620 = vdwg.mxu0
        %v621 = vld [vmem:[%s467] sm:$0xf]
        %v622 = vld [vmem:[%s467 + $0x4] sm:$0xf]
        %v623 = vld [vmem:[%s467 + $0x8] sm:$0xf]
        %v624 = vld [vmem:[%s467 + $0xc] sm:$0xf]
        %v625 = vperm.slane %v493, 4
        %v630 = vunpack.c.l.b16 %v621
        %v631 = vunpack.c.l.b16 %v622
        %v632 = vunpack.c.l.b16 %v623
        %v633 = vunpack.c.l.b16 %v624
        %v634 = vpack.c.b16 %v631, %v630
        %v635 = vpack.c.b16 %v633, %v632
        %638 = vmatpush.bf16.msra.mxu0 0
        %639 = vmatpush.bf16.msra.mxu0 0
        %640 = vmatpush.bf16.msra.mxu0 0
        %641 = vmatpush.bf16.msra.mxu0 0
        %642 = vmatpush.bf16.msra.mxu0 0
        %643 = vmatpush.bf16.msra.mxu0 0
        %644 = vmatpush.bf16.msra.mxu0 %v635
        %645 = vmatpush.bf16.msra.mxu0 %v634
        %646 = vmatmul.bf16.gmra.mxu0 %v574
        %v647 = vpop.f32.mrf.mxu0
        %v648 = vadd.f32 %v625, %v647
        %v649 = vpop.f32.mrf.mxu0
        %v650 = vadd.f32 %v625, %v649
        %651 = vdwg.mxu0
        %654 = vrot.lane.b32.xlu0 %v586, 120
        %v655 = vpop.permute.xlu0 %654
        %656 = vrot.lane.b32.xlu0 %v588, 120
        %v657 = vpop.permute.xlu0 %656
        %660 = vrot.lane.b32.xlu0 %v586, 112
        %v661 = vpop.permute.xlu0 %660
        %662 = vrot.lane.b32.xlu0 %v588, 112
        %v663 = vpop.permute.xlu0 %662
        %666 = vrot.lane.b32.xlu0 %v586, 104
        %v667 = vpop.permute.xlu0 %666
        %668 = vrot.lane.b32.xlu0 %v588, 104
        %v669 = vpop.permute.xlu0 %668
        %v672 = vrot.slane %v661, 4
        %vm673 = vcmask 1047556
        %v674 = vsel %vm673, %v672, %v586
        %v675 = vrot.slane %v586, 4
        %v676 = vsel %vm673, %v661, %v675
        %v678 = vunpack.c.l.s4 1983009808
        %v679 = vunpack.c.0.s8 %v678
        %v680 = vperm.slane %v674, %v679
        %v682 = vunpack.c.l.s4 1983009808
        %v683 = vunpack.c.0.s8 %v682
        %v684 = vperm.slane %v676, %v683
        %v685 = vrot.slane %v667, 4
        %v686 = vsel %vm673, %v685, %v655
        %v687 = vrot.slane %v655, 4
        %v688 = vsel %vm673, %v667, %v687
        %v690 = vunpack.c.l.s4 1983009808
        %v691 = vunpack.c.0.s8 %v690
        %v692 = vperm.slane %v686, %v691
        %v694 = vunpack.c.l.s4 1983009808
        %v695 = vunpack.c.0.s8 %v694
        %v696 = vperm.slane %v688, %v695
        %v697 = vrot.slane %v692, 4
        %v698 = vsel %vm673, %v697, %v680
        %v699 = vrot.slane %v680, 4
        %v700 = vsel %vm673, %v692, %v699
        %v702 = vunpack.c.l.s4 1934713408
        %v703 = vunpack.c.0.s8 %v702
        %v704 = vperm.slane %v698, %v703
        %v706 = vunpack.c.l.s4 1934713408
        %v707 = vunpack.c.0.s8 %v706
        %v708 = vperm.slane %v700, %v707
        %v709 = vrot.slane %v696, 4
        %v710 = vsel %vm673, %v709, %v684
        %v711 = vrot.slane %v684, 4
        %v712 = vsel %vm673, %v696, %v711
        %v714 = vunpack.c.l.s4 1934713408
        %v715 = vunpack.c.0.s8 %v714
        %v716 = vperm.slane %v710, %v715
        %v718 = vunpack.c.l.s4 1934713408
        %v719 = vunpack.c.0.s8 %v718
        %v720 = vperm.slane %v712, %v719
        %v721 = vrot.slane %v704, 4
        %v722 = vsel %vm673, 0.0, %v721
        %v723 = vrot.slane %v708, 4
        %v724 = vsel %vm673, 0.0, %v723
        %v725 = vrot.slane %v716, 4
        %v726 = vsel %vm673, 0.0, %v725
        %v727 = vrot.slane %v720, 4
        %v728 = vsel %vm673, 0.0, %v727
        %v729 = vrot.slane %v663, 4
        %v730 = vsel %vm673, %v729, %v588
        %v731 = vrot.slane %v588, 4
        %v732 = vsel %vm673, %v663, %v731
        %v734 = vunpack.c.l.s4 1983009808
        %v735 = vunpack.c.0.s8 %v734
        %v736 = vperm.slane %v730, %v735
        %v738 = vunpack.c.l.s4 1983009808
        %v739 = vunpack.c.0.s8 %v738
        %v740 = vperm.slane %v732, %v739
        %v741 = vrot.slane %v669, 4
        %v742 = vsel %vm673, %v741, %v657
        %v743 = vrot.slane %v657, 4
        %v744 = vsel %vm673, %v669, %v743
        %v746 = vunpack.c.l.s4 1983009808
        %v747 = vunpack.c.0.s8 %v746
        %v748 = vperm.slane %v742, %v747
        %v750 = vunpack.c.l.s4 1983009808
        %v751 = vunpack.c.0.s8 %v750
        %v752 = vperm.slane %v744, %v751
        %v753 = vrot.slane %v748, 4
        %v754 = vsel %vm673, %v753, %v736
        %v755 = vrot.slane %v736, 4
        %v756 = vsel %vm673, %v748, %v755
        %v758 = vunpack.c.l.s4 1934713408
        %v759 = vunpack.c.0.s8 %v758
        %v760 = vperm.slane %v754, %v759
        %v762 = vunpack.c.l.s4 1934713408
        %v763 = vunpack.c.0.s8 %v762
        %v764 = vperm.slane %v756, %v763
        %v765 = vrot.slane %v752, 4
        %v766 = vsel %vm673, %v765, %v740
        %v767 = vrot.slane %v740, 4
        %v768 = vsel %vm673, %v752, %v767
        %v770 = vunpack.c.l.s4 1934713408
        %v771 = vunpack.c.0.s8 %v770
        %v772 = vperm.slane %v766, %v771
        %v774 = vunpack.c.l.s4 1934713408
        %v775 = vunpack.c.0.s8 %v774
        %v776 = vperm.slane %v768, %v775
        %v777 = vrot.slane %v760, 4
        %v778 = vsel %vm673, 0.0, %v777
        %v779 = vrot.slane %v764, 4
        %v780 = vsel %vm673, 0.0, %v779
        %v781 = vrot.slane %v772, 4
        %v782 = vsel %vm673, 0.0, %v781
        %v783 = vrot.slane %v776, 4
        %v784 = vsel %vm673, 0.0, %v783
        %787 = vrot.lane.b32.xlu0 %v617, 120
        %v788 = vpop.permute.xlu0 %787
        %789 = vrot.lane.b32.xlu0 %v619, 120
        %v790 = vpop.permute.xlu0 %789
        %793 = vrot.lane.b32.xlu0 %v617, 112
        %v794 = vpop.permute.xlu0 %793
        %795 = vrot.lane.b32.xlu0 %v619, 112
        %v796 = vpop.permute.xlu0 %795
        %799 = vrot.lane.b32.xlu0 %v617, 104
        %v800 = vpop.permute.xlu0 %799
        %801 = vrot.lane.b32.xlu0 %v619, 104
        %v802 = vpop.permute.xlu0 %801
        %v805 = vrot.slane %v794, 4
        %v806 = vsel %vm673, %v805, %v617
        %v807 = vrot.slane %v617, 4
        %v808 = vsel %vm673, %v794, %v807
        %v810 = vunpack.c.l.s4 1983009808
        %v811 = vunpack.c.0.s8 %v810
        %v812 = vperm.slane %v806, %v811
        %v814 = vunpack.c.l.s4 1983009808
        %v815 = vunpack.c.0.s8 %v814
        %v816 = vperm.slane %v808, %v815
        %v817 = vrot.slane %v800, 4
        %v818 = vsel %vm673, %v817, %v788
        %v819 = vrot.slane %v788, 4
        %v820 = vsel %vm673, %v800, %v819
        %v822 = vunpack.c.l.s4 1983009808
        %v823 = vunpack.c.0.s8 %v822
        %v824 = vperm.slane %v818, %v823
        %v826 = vunpack.c.l.s4 1983009808
        %v827 = vunpack.c.0.s8 %v826
        %v828 = vperm.slane %v820, %v827
        %v829 = vrot.slane %v824, 4
        %v830 = vsel %vm673, %v829, %v812
        %v831 = vrot.slane %v812, 4
        %v832 = vsel %vm673, %v824, %v831
        %v834 = vunpack.c.l.s4 1934713408
        %v835 = vunpack.c.0.s8 %v834
        %v836 = vperm.slane %v830, %v835
        %v838 = vunpack.c.l.s4 1934713408
        %v839 = vunpack.c.0.s8 %v838
        %v840 = vperm.slane %v832, %v839
        %v841 = vrot.slane %v828, 4
        %v842 = vsel %vm673, %v841, %v816
        %v843 = vrot.slane %v816, 4
        %v844 = vsel %vm673, %v828, %v843
        %v846 = vunpack.c.l.s4 1934713408
        %v847 = vunpack.c.0.s8 %v846
        %v848 = vperm.slane %v842, %v847
        %v850 = vunpack.c.l.s4 1934713408
        %v851 = vunpack.c.0.s8 %v850
        %v852 = vperm.slane %v844, %v851
        %v853 = vrot.slane %v836, 4
        %v854 = vsel %vm673, 0.0, %v853
        %v855 = vrot.slane %v840, 4
        %v856 = vsel %vm673, 0.0, %v855
        %v857 = vrot.slane %v848, 4
        %v858 = vsel %vm673, 0.0, %v857
        %v859 = vrot.slane %v852, 4
        %v860 = vsel %vm673, 0.0, %v859
        %v861 = vrot.slane %v796, 4
        %v862 = vsel %vm673, %v861, %v619
        %v863 = vrot.slane %v619, 4
        %v864 = vsel %vm673, %v796, %v863
        %v866 = vunpack.c.l.s4 1983009808
        %v867 = vunpack.c.0.s8 %v866
        %v868 = vperm.slane %v862, %v867
        %v870 = vunpack.c.l.s4 1983009808
        %v871 = vunpack.c.0.s8 %v870
        %v872 = vperm.slane %v864, %v871
        %v873 = vrot.slane %v802, 4
        %v874 = vsel %vm673, %v873, %v790
        %v875 = vrot.slane %v790, 4
        %v876 = vsel %vm673, %v802, %v875
        %v878 = vunpack.c.l.s4 1983009808
        %v879 = vunpack.c.0.s8 %v878
        %v880 = vperm.slane %v874, %v879
        %v882 = vunpack.c.l.s4 1983009808
        %v883 = vunpack.c.0.s8 %v882
        %v884 = vperm.slane %v876, %v883
        %v885 = vrot.slane %v880, 4
        %v886 = vsel %vm673, %v885, %v868
        %v887 = vrot.slane %v868, 4
        %v888 = vsel %vm673, %v880, %v887
        %v890 = vunpack.c.l.s4 1934713408
        %v891 = vunpack.c.0.s8 %v890
        %v892 = vperm.slane %v886, %v891
        %v894 = vunpack.c.l.s4 1934713408
        %v895 = vunpack.c.0.s8 %v894
        %v896 = vperm.slane %v888, %v895
        %v897 = vrot.slane %v884, 4
        %v898 = vsel %vm673, %v897, %v872
        %v899 = vrot.slane %v872, 4
        %v900 = vsel %vm673, %v884, %v899
        %v902 = vunpack.c.l.s4 1934713408
        %v903 = vunpack.c.0.s8 %v902
        %v904 = vperm.slane %v898, %v903
        %v906 = vunpack.c.l.s4 1934713408
        %v907 = vunpack.c.0.s8 %v906
        %v908 = vperm.slane %v900, %v907
        %v909 = vrot.slane %v892, 4
        %v910 = vsel %vm673, 0.0, %v909
        %v911 = vrot.slane %v896, 4
        %v912 = vsel %vm673, 0.0, %v911
        %v913 = vrot.slane %v904, 4
        %v914 = vsel %vm673, 0.0, %v913
        %v915 = vrot.slane %v908, 4
        %v916 = vsel %vm673, 0.0, %v915
        %919 = vrot.lane.b32.xlu0 %v648, 120
        %v920 = vpop.permute.xlu0 %919
        %921 = vrot.lane.b32.xlu0 %v650, 120
        %v922 = vpop.permute.xlu0 %921
        %925 = vrot.lane.b32.xlu0 %v648, 112
        %v926 = vpop.permute.xlu0 %925
        %927 = vrot.lane.b32.xlu0 %v650, 112
        %v928 = vpop.permute.xlu0 %927
        %931 = vrot.lane.b32.xlu0 %v648, 104
        %v932 = vpop.permute.xlu0 %931
        %933 = vrot.lane.b32.xlu0 %v650, 104
        %v934 = vpop.permute.xlu0 %933
        %v937 = vrot.slane %v926, 4
        %v938 = vsel %vm673, %v937, %v648
        %v939 = vrot.slane %v648, 4
        %v940 = vsel %vm673, %v926, %v939
        %v942 = vunpack.c.l.s4 1983009808
        %v943 = vunpack.c.0.s8 %v942
        %v944 = vperm.slane %v938, %v943
        %v946 = vunpack.c.l.s4 1983009808
        %v947 = vunpack.c.0.s8 %v946
        %v948 = vperm.slane %v940, %v947
        %v949 = vrot.slane %v932, 4
        %v950 = vsel %vm673, %v949, %v920
        %v951 = vrot.slane %v920, 4
        %v952 = vsel %vm673, %v932, %v951
        %v954 = vunpack.c.l.s4 1983009808
        %v955 = vunpack.c.0.s8 %v954
        %v956 = vperm.slane %v950, %v955
        %v958 = vunpack.c.l.s4 1983009808
        %v959 = vunpack.c.0.s8 %v958
        %v960 = vperm.slane %v952, %v959
        %v961 = vrot.slane %v956, 4
        %v962 = vsel %vm673, %v961, %v944
        %v963 = vrot.slane %v944, 4
        %v964 = vsel %vm673, %v956, %v963
        %v966 = vunpack.c.l.s4 1934713408
        %v967 = vunpack.c.0.s8 %v966
        %v968 = vperm.slane %v962, %v967
        %v970 = vunpack.c.l.s4 1934713408
        %v971 = vunpack.c.0.s8 %v970
        %v972 = vperm.slane %v964, %v971
        %v973 = vrot.slane %v960, 4
        %v974 = vsel %vm673, %v973, %v948
        %v975 = vrot.slane %v948, 4
        %v976 = vsel %vm673, %v960, %v975
        %v978 = vunpack.c.l.s4 1934713408
        %v979 = vunpack.c.0.s8 %v978
        %v980 = vperm.slane %v974, %v979
        %v982 = vunpack.c.l.s4 1934713408
        %v983 = vunpack.c.0.s8 %v982
        %v984 = vperm.slane %v976, %v983
        %v985 = vrot.slane %v968, 4
        %v986 = vsel %vm673, 0.0, %v985
        %v987 = vrot.slane %v972, 4
        %v988 = vsel %vm673, 0.0, %v987
        %v989 = vrot.slane %v980, 4
        %v990 = vsel %vm673, 0.0, %v989
        %v991 = vrot.slane %v984, 4
        %v992 = vsel %vm673, 0.0, %v991
        %v993 = vrot.slane %v928, 4
        %v994 = vsel %vm673, %v993, %v650
        %v995 = vrot.slane %v650, 4
        %v996 = vsel %vm673, %v928, %v995
        %v998 = vunpack.c.l.s4 1983009808
        %v999 = vunpack.c.0.s8 %v998
        %v1000 = vperm.slane %v994, %v999
        %v1002 = vunpack.c.l.s4 1983009808
        %v1003 = vunpack.c.0.s8 %v1002
        %v1004 = vperm.slane %v996, %v1003
        %v1005 = vrot.slane %v934, 4
        %v1006 = vsel %vm673, %v1005, %v922
        %v1007 = vrot.slane %v922, 4
        %v1008 = vsel %vm673, %v934, %v1007
        %v1010 = vunpack.c.l.s4 1983009808
        %v1011 = vunpack.c.0.s8 %v1010
        %v1012 = vperm.slane %v1006, %v1011
        %v1014 = vunpack.c.l.s4 1983009808
        %v1015 = vunpack.c.0.s8 %v1014
        %v1016 = vperm.slane %v1008, %v1015
        %v1017 = vrot.slane %v1012, 4
        %v1018 = vsel %vm673, %v1017, %v1000
        %v1019 = vrot.slane %v1000, 4
        %v1020 = vsel %vm673, %v1012, %v1019
        %v1022 = vunpack.c.l.s4 1934713408
        %v1023 = vunpack.c.0.s8 %v1022
        %v1024 = vperm.slane %v1018, %v1023
        %v1026 = vunpack.c.l.s4 1934713408
        %v1027 = vunpack.c.0.s8 %v1026
        %v1028 = vperm.slane %v1020, %v1027
        %v1029 = vrot.slane %v1016, 4
        %v1030 = vsel %vm673, %v1029, %v1004
        %v1031 = vrot.slane %v1004, 4
        %v1032 = vsel %vm673, %v1016, %v1031
        %v1034 = vunpack.c.l.s4 1934713408
        %v1035 = vunpack.c.0.s8 %v1034
        %v1036 = vperm.slane %v1030, %v1035
        %v1038 = vunpack.c.l.s4 1934713408
        %v1039 = vunpack.c.0.s8 %v1038
        %v1040 = vperm.slane %v1032, %v1039
        %v1041 = vrot.slane %v1024, 4
        %v1042 = vsel %vm673, 0.0, %v1041
        %v1043 = vrot.slane %v1028, 4
        %v1044 = vsel %vm673, 0.0, %v1043
        %v1045 = vrot.slane %v1036, 4
        %v1046 = vsel %vm673, 0.0, %v1045
        %v1047 = vrot.slane %v1040, 4
        %v1048 = vsel %vm673, 0.0, %v1047
        %v1049 = vld [vmem:[%s1] sm:$0xff]
        %v1051 = vrot.slane %v1049, 1
        %v1052 = vrot.slane %v1049, 2
        %v1053 = vrot.slane %v1049, 3
        %v1054 = vrot.slane %v1049, 4
        %v1055 = vrot.slane %v1049, 5
        %v1056 = vrot.slane %v1049, 6
        %v1057 = vrot.slane %v1049, 7
        %v1058 = vld [vmem:[%s2] sm:$0xff]
        %v1060 = vrot.slane %v1058, 1
        %v1061 = vrot.slane %v1058, 2
        %v1062 = vrot.slane %v1058, 3
        %v1063 = vrot.slane %v1058, 4
        %v1064 = vrot.slane %v1058, 5
        %v1065 = vrot.slane %v1058, 6
        %v1066 = vrot.slane %v1058, 7
        %v1067 = vsub.f32 0.0, %v704
        %v1068 = vsub.f32 0.0, %v722
        %v1069 = vsub.f32 0.0, %v708
        %v1070 = vsub.f32 0.0, %v724
        %v1071 = vsub.f32 0.0, %v716
        %v1072 = vsub.f32 0.0, %v726
        %v1073 = vsub.f32 0.0, %v720
        %v1074 = vsub.f32 0.0, %v728
        %v1075 = vsub.f32 0.0, %v760
        %v1076 = vsub.f32 0.0, %v778
        %v1077 = vsub.f32 0.0, %v764
        %v1078 = vsub.f32 0.0, %v780
        %v1079 = vsub.f32 0.0, %v772
        %v1080 = vsub.f32 0.0, %v782
        %v1081 = vsub.f32 0.0, %v776
        %v1082 = vsub.f32 0.0, %v784
        %1099 = vrot.lane.b32.xlu0 %v1067, 124
        %v1100 = vpop.permute.xlu0 %1099
        %1101 = vrot.lane.b32.xlu0 %v1068, 124
        %v1102 = vpop.permute.xlu0 %1101
        %1103 = vrot.lane.b32.xlu0 %v1069, 124
        %v1104 = vpop.permute.xlu0 %1103
        %1105 = vrot.lane.b32.xlu0 %v1070, 124
        %v1106 = vpop.permute.xlu0 %1105
        %1107 = vrot.lane.b32.xlu0 %v1071, 124
        %v1108 = vpop.permute.xlu0 %1107
        %1109 = vrot.lane.b32.xlu0 %v1072, 124
        %v1110 = vpop.permute.xlu0 %1109
        %1111 = vrot.lane.b32.xlu0 %v1073, 124
        %v1112 = vpop.permute.xlu0 %1111
        %1113 = vrot.lane.b32.xlu0 %v1074, 124
        %v1114 = vpop.permute.xlu0 %1113
        %1115 = vrot.lane.b32.xlu0 %v1075, 124
        %v1116 = vpop.permute.xlu0 %1115
        %1117 = vrot.lane.b32.xlu0 %v1076, 124
        %v1118 = vpop.permute.xlu0 %1117
        %1119 = vrot.lane.b32.xlu0 %v1077, 124
        %v1120 = vpop.permute.xlu0 %1119
        %1121 = vrot.lane.b32.xlu0 %v1078, 124
        %v1122 = vpop.permute.xlu0 %1121
        %1123 = vrot.lane.b32.xlu0 %v1079, 124
        %v1124 = vpop.permute.xlu0 %1123
        %1125 = vrot.lane.b32.xlu0 %v1080, 124
        %v1126 = vpop.permute.xlu0 %1125
        %1127 = vrot.lane.b32.xlu0 %v1081, 124
        %v1128 = vpop.permute.xlu0 %1127
        %1129 = vrot.lane.b32.xlu0 %v1082, 124
        %v1130 = vpop.permute.xlu0 %1129
        %1163 = vrot.lane.b32.xlu0 %v704, 4
        %v1164 = vpop.permute.xlu0 %1163
        %1165 = vrot.lane.b32.xlu0 %v722, 4
        %v1166 = vpop.permute.xlu0 %1165
        %1167 = vrot.lane.b32.xlu0 %v708, 4
        %v1168 = vpop.permute.xlu0 %1167
        %1169 = vrot.lane.b32.xlu0 %v724, 4
        %v1170 = vpop.permute.xlu0 %1169
        %1171 = vrot.lane.b32.xlu0 %v716, 4
        %v1172 = vpop.permute.xlu0 %1171
        %1173 = vrot.lane.b32.xlu0 %v726, 4
        %v1174 = vpop.permute.xlu0 %1173
        %1175 = vrot.lane.b32.xlu0 %v720, 4
        %v1176 = vpop.permute.xlu0 %1175
        %1177 = vrot.lane.b32.xlu0 %v728, 4
        %v1178 = vpop.permute.xlu0 %1177
        %1179 = vrot.lane.b32.xlu0 %v760, 4
        %v1180 = vpop.permute.xlu0 %1179
        %1181 = vrot.lane.b32.xlu0 %v778, 4
        %v1182 = vpop.permute.xlu0 %1181
        %1183 = vrot.lane.b32.xlu0 %v764, 4
        %v1184 = vpop.permute.xlu0 %1183
        %1185 = vrot.lane.b32.xlu0 %v780, 4
        %v1186 = vpop.permute.xlu0 %1185
        %1187 = vrot.lane.b32.xlu0 %v772, 4
        %v1188 = vpop.permute.xlu0 %1187
        %1189 = vrot.lane.b32.xlu0 %v782, 4
        %v1190 = vpop.permute.xlu0 %1189
        %1191 = vrot.lane.b32.xlu0 %v776, 4
        %v1192 = vpop.permute.xlu0 %1191
        %1193 = vrot.lane.b32.xlu0 %v784, 4
        %v1194 = vpop.permute.xlu0 %1193
        %vm1211 = vcmask 31744
        %v1212 = vsel %vm1211, %v1100, %v1164
        %v1213 = vsel %vm1211, %v1102, %v1166
        %v1214 = vsel %vm1211, %v1104, %v1168
        %v1215 = vsel %vm1211, %v1106, %v1170
        %v1216 = vsel %vm1211, %v1108, %v1172
        %v1217 = vsel %vm1211, %v1110, %v1174
        %v1218 = vsel %vm1211, %v1112, %v1176
        %v1219 = vsel %vm1211, %v1114, %v1178
        %v1220 = vsel %vm1211, %v1116, %v1180
        %v1221 = vsel %vm1211, %v1118, %v1182
        %v1222 = vsel %vm1211, %v1120, %v1184
        %v1223 = vsel %vm1211, %v1122, %v1186
        %v1224 = vsel %vm1211, %v1124, %v1188
        %v1225 = vsel %vm1211, %v1126, %v1190
        %v1226 = vsel %vm1211, %v1128, %v1192
        %v1227 = vsel %vm1211, %v1130, %v1194
        %v1228 = vperm.slane %v1049, 0
        %v1229 = vperm.slane %v1051, 0
        %v1230 = vperm.slane %v1052, 0
        %v1231 = vperm.slane %v1053, 0
        %v1232 = vperm.slane %v1054, 0
        %v1233 = vperm.slane %v1055, 0
        %v1234 = vperm.slane %v1056, 0
        %v1235 = vperm.slane %v1057, 0
        %v1244 = vmul.f32 %v704, %v1228
        %v1245 = vmul.f32 %v722, %v1229
        %v1246 = vmul.f32 %v708, %v1230
        %v1247 = vmul.f32 %v724, %v1231
        %v1248 = vmul.f32 %v716, %v1232
        %v1249 = vmul.f32 %v726, %v1233
        %v1250 = vmul.f32 %v720, %v1234
        %v1251 = vmul.f32 %v728, %v1235
        %v1252 = vmul.f32 %v760, %v1228
        %v1253 = vmul.f32 %v778, %v1229
        %v1254 = vmul.f32 %v764, %v1230
        %v1255 = vmul.f32 %v780, %v1231
        %v1256 = vmul.f32 %v772, %v1232
        %v1257 = vmul.f32 %v782, %v1233
        %v1258 = vmul.f32 %v776, %v1234
        %v1259 = vmul.f32 %v784, %v1235
        %v1260 = vperm.slane %v1058, 0
        %v1261 = vperm.slane %v1060, 0
        %v1262 = vperm.slane %v1061, 0
        %v1263 = vperm.slane %v1062, 0
        %v1264 = vperm.slane %v1063, 0
        %v1265 = vperm.slane %v1064, 0
        %v1266 = vperm.slane %v1065, 0
        %v1267 = vperm.slane %v1066, 0
        %v1276 = vmul.f32 %v1212, %v1260
        %v1277 = vmul.f32 %v1213, %v1261
        %v1278 = vmul.f32 %v1214, %v1262
        %v1279 = vmul.f32 %v1215, %v1263
        %v1280 = vmul.f32 %v1216, %v1264
        %v1281 = vmul.f32 %v1217, %v1265
        %v1282 = vmul.f32 %v1218, %v1266
        %v1283 = vmul.f32 %v1219, %v1267
        %v1284 = vmul.f32 %v1220, %v1260
        %v1285 = vmul.f32 %v1221, %v1261
        %v1286 = vmul.f32 %v1222, %v1262
        %v1287 = vmul.f32 %v1223, %v1263
        %v1288 = vmul.f32 %v1224, %v1264
        %v1289 = vmul.f32 %v1225, %v1265
        %v1290 = vmul.f32 %v1226, %v1266
        %v1291 = vmul.f32 %v1227, %v1267
        %v1292 = vadd.f32 %v1244, %v1276
        %v1293 = vadd.f32 %v1245, %v1277
        %v1294 = vadd.f32 %v1246, %v1278
        %v1295 = vadd.f32 %v1247, %v1279
        %v1296 = vadd.f32 %v1248, %v1280
        %v1297 = vadd.f32 %v1249, %v1281
        %v1298 = vadd.f32 %v1250, %v1282
        %v1299 = vadd.f32 %v1251, %v1283
        %v1300 = vadd.f32 %v1252, %v1284
        %v1301 = vadd.f32 %v1253, %v1285
        %v1302 = vadd.f32 %v1254, %v1286
        %v1303 = vadd.f32 %v1255, %v1287
        %v1304 = vadd.f32 %v1256, %v1288
        %v1305 = vadd.f32 %v1257, %v1289
        %v1306 = vadd.f32 %v1258, %v1290
        %v1307 = vadd.f32 %v1259, %v1291
        %v1308 = vsub.f32 0.0, %v836
        %v1309 = vsub.f32 0.0, %v854
        %v1310 = vsub.f32 0.0, %v840
        %v1311 = vsub.f32 0.0, %v856
        %v1312 = vsub.f32 0.0, %v848
        %v1313 = vsub.f32 0.0, %v858
        %v1314 = vsub.f32 0.0, %v852
        %v1315 = vsub.f32 0.0, %v860
        %v1316 = vsub.f32 0.0, %v892
        %v1317 = vsub.f32 0.0, %v910
        %v1318 = vsub.f32 0.0, %v896
        %v1319 = vsub.f32 0.0, %v912
        %v1320 = vsub.f32 0.0, %v904
        %v1321 = vsub.f32 0.0, %v914
        %v1322 = vsub.f32 0.0, %v908
        %v1323 = vsub.f32 0.0, %v916
        %1340 = vrot.lane.b32.xlu0 %v1308, 124
        %v1341 = vpop.permute.xlu0 %1340
        %1342 = vrot.lane.b32.xlu0 %v1309, 124
        %v1343 = vpop.permute.xlu0 %1342
        %1344 = vrot.lane.b32.xlu0 %v1310, 124
        %v1345 = vpop.permute.xlu0 %1344
        %1346 = vrot.lane.b32.xlu0 %v1311, 124
        %v1347 = vpop.permute.xlu0 %1346
        %1348 = vrot.lane.b32.xlu0 %v1312, 124
        %v1349 = vpop.permute.xlu0 %1348
        %1350 = vrot.lane.b32.xlu0 %v1313, 124
        %v1351 = vpop.permute.xlu0 %1350
        %1352 = vrot.lane.b32.xlu0 %v1314, 124
        %v1353 = vpop.permute.xlu0 %1352
        %1354 = vrot.lane.b32.xlu0 %v1315, 124
        %v1355 = vpop.permute.xlu0 %1354
        %1356 = vrot.lane.b32.xlu0 %v1316, 124
        %v1357 = vpop.permute.xlu0 %1356
        %1358 = vrot.lane.b32.xlu0 %v1317, 124
        %v1359 = vpop.permute.xlu0 %1358
        %1360 = vrot.lane.b32.xlu0 %v1318, 124
        %v1361 = vpop.permute.xlu0 %1360
        %1362 = vrot.lane.b32.xlu0 %v1319, 124
        %v1363 = vpop.permute.xlu0 %1362
        %1364 = vrot.lane.b32.xlu0 %v1320, 124
        %v1365 = vpop.permute.xlu0 %1364
        %1366 = vrot.lane.b32.xlu0 %v1321, 124
        %v1367 = vpop.permute.xlu0 %1366
        %1368 = vrot.lane.b32.xlu0 %v1322, 124
        %v1369 = vpop.permute.xlu0 %1368
        %1370 = vrot.lane.b32.xlu0 %v1323, 124
        %v1371 = vpop.permute.xlu0 %1370
        %1404 = vrot.lane.b32.xlu0 %v836, 4
        %v1405 = vpop.permute.xlu0 %1404
        %1406 = vrot.lane.b32.xlu0 %v854, 4
        %v1407 = vpop.permute.xlu0 %1406
        %1408 = vrot.lane.b32.xlu0 %v840, 4
        %v1409 = vpop.permute.xlu0 %1408
        %1410 = vrot.lane.b32.xlu0 %v856, 4
        %v1411 = vpop.permute.xlu0 %1410
        %1412 = vrot.lane.b32.xlu0 %v848, 4
        %v1413 = vpop.permute.xlu0 %1412
        %1414 = vrot.lane.b32.xlu0 %v858, 4
        %v1415 = vpop.permute.xlu0 %1414
        %1416 = vrot.lane.b32.xlu0 %v852, 4
        %v1417 = vpop.permute.xlu0 %1416
        %1418 = vrot.lane.b32.xlu0 %v860, 4
        %v1419 = vpop.permute.xlu0 %1418
        %1420 = vrot.lane.b32.xlu0 %v892, 4
        %v1421 = vpop.permute.xlu0 %1420
        %1422 = vrot.lane.b32.xlu0 %v910, 4
        %v1423 = vpop.permute.xlu0 %1422
        %1424 = vrot.lane.b32.xlu0 %v896, 4
        %v1425 = vpop.permute.xlu0 %1424
        %1426 = vrot.lane.b32.xlu0 %v912, 4
        %v1427 = vpop.permute.xlu0 %1426
        %1428 = vrot.lane.b32.xlu0 %v904, 4
        %v1429 = vpop.permute.xlu0 %1428
        %1430 = vrot.lane.b32.xlu0 %v914, 4
        %v1431 = vpop.permute.xlu0 %1430
        %1432 = vrot.lane.b32.xlu0 %v908, 4
        %v1433 = vpop.permute.xlu0 %1432
        %1434 = vrot.lane.b32.xlu0 %v916, 4
        %v1435 = vpop.permute.xlu0 %1434
        %v1452 = vsel %vm1211, %v1341, %v1405
        %v1453 = vsel %vm1211, %v1343, %v1407
        %v1454 = vsel %vm1211, %v1345, %v1409
        %v1455 = vsel %vm1211, %v1347, %v1411
        %v1456 = vsel %vm1211, %v1349, %v1413
        %v1457 = vsel %vm1211, %v1351, %v1415
        %v1458 = vsel %vm1211, %v1353, %v1417
        %v1459 = vsel %vm1211, %v1355, %v1419
        %v1460 = vsel %vm1211, %v1357, %v1421
        %v1461 = vsel %vm1211, %v1359, %v1423
        %v1462 = vsel %vm1211, %v1361, %v1425
        %v1463 = vsel %vm1211, %v1363, %v1427
        %v1464 = vsel %vm1211, %v1365, %v1429
        %v1465 = vsel %vm1211, %v1367, %v1431
        %v1466 = vsel %vm1211, %v1369, %v1433
        %v1467 = vsel %vm1211, %v1371, %v1435
        %v1468 = vmul.f32 %v836, %v1228
        %v1469 = vmul.f32 %v854, %v1229
        %v1470 = vmul.f32 %v840, %v1230
        %v1471 = vmul.f32 %v856, %v1231
        %v1472 = vmul.f32 %v848, %v1232
        %v1473 = vmul.f32 %v858, %v1233
        %v1474 = vmul.f32 %v852, %v1234
        %v1475 = vmul.f32 %v860, %v1235
        %v1476 = vmul.f32 %v892, %v1228
        %v1477 = vmul.f32 %v910, %v1229
        %v1478 = vmul.f32 %v896, %v1230
        %v1479 = vmul.f32 %v912, %v1231
        %v1480 = vmul.f32 %v904, %v1232
        %v1481 = vmul.f32 %v914, %v1233
        %v1482 = vmul.f32 %v908, %v1234
        %v1483 = vmul.f32 %v916, %v1235
        %v1484 = vmul.f32 %v1452, %v1260
        %v1485 = vmul.f32 %v1453, %v1261
        %v1486 = vmul.f32 %v1454, %v1262
        %v1487 = vmul.f32 %v1455, %v1263
        %v1488 = vmul.f32 %v1456, %v1264
        %v1489 = vmul.f32 %v1457, %v1265
        %v1490 = vmul.f32 %v1458, %v1266
        %v1491 = vmul.f32 %v1459, %v1267
        %v1492 = vmul.f32 %v1460, %v1260
        %v1493 = vmul.f32 %v1461, %v1261
        %v1494 = vmul.f32 %v1462, %v1262
        %v1495 = vmul.f32 %v1463, %v1263
        %v1496 = vmul.f32 %v1464, %v1264
        %v1497 = vmul.f32 %v1465, %v1265
        %v1498 = vmul.f32 %v1466, %v1266
        %v1499 = vmul.f32 %v1467, %v1267
        %v1500 = vadd.f32 %v1468, %v1484
        %v1501 = vadd.f32 %v1469, %v1485
        %v1502 = vadd.f32 %v1470, %v1486
        %v1503 = vadd.f32 %v1471, %v1487
        %v1504 = vadd.f32 %v1472, %v1488
        %v1505 = vadd.f32 %v1473, %v1489
        %v1506 = vadd.f32 %v1474, %v1490
        %v1507 = vadd.f32 %v1475, %v1491
        %v1508 = vadd.f32 %v1476, %v1492
        %v1509 = vadd.f32 %v1477, %v1493
        %v1510 = vadd.f32 %v1478, %v1494
        %v1511 = vadd.f32 %v1479, %v1495
        %v1512 = vadd.f32 %v1480, %v1496
        %v1513 = vadd.f32 %v1481, %v1497
        %v1514 = vadd.f32 %v1482, %v1498
        %v1515 = vadd.f32 %v1483, %v1499
        %v1516 = vrot.slane %v1294, 4
        %v1517 = vsel %vm673, %v1516, %v1292
        %v1519 = vunpack.c.l.s4 1983009808
        %v1520 = vunpack.c.0.s8 %v1519
        %v1521 = vperm.slane %v1517, %v1520
        %v1522 = vrot.slane %v1295, 4
        %v1523 = vsel %vm673, %v1522, %v1293
        %v1525 = vunpack.c.l.s4 1983009808
        %v1526 = vunpack.c.0.s8 %v1525
        %v1527 = vperm.slane %v1523, %v1526
        %v1528 = vrot.slane %v1298, 4
        %v1529 = vsel %vm673, %v1528, %v1296
        %v1531 = vunpack.c.l.s4 1983009808
        %v1532 = vunpack.c.0.s8 %v1531
        %v1533 = vperm.slane %v1529, %v1532
        %v1534 = vrot.slane %v1299, 4
        %v1535 = vsel %vm673, %v1534, %v1297
        %v1537 = vunpack.c.l.s4 1983009808
        %v1538 = vunpack.c.0.s8 %v1537
        %v1539 = vperm.slane %v1535, %v1538
        %v1540 = vrot.slane %v1527, 4
        %v1541 = vsel %vm673, %v1540, %v1521
        %v1542 = vrot.slane %v1521, 4
        %v1543 = vsel %vm673, %v1527, %v1542
        %v1545 = vunpack.c.l.s4 1934713408
        %v1546 = vunpack.c.0.s8 %v1545
        %v1547 = vperm.slane %v1541, %v1546
        %v1549 = vunpack.c.l.s4 1934713408
        %v1550 = vunpack.c.0.s8 %v1549
        %v1551 = vperm.slane %v1543, %v1550
        %v1552 = vrot.slane %v1539, 4
        %v1553 = vsel %vm673, %v1552, %v1533
        %v1554 = vrot.slane %v1533, 4
        %v1555 = vsel %vm673, %v1539, %v1554
        %v1557 = vunpack.c.l.s4 1934713408
        %v1558 = vunpack.c.0.s8 %v1557
        %v1559 = vperm.slane %v1553, %v1558
        %v1561 = vunpack.c.l.s4 1934713408
        %v1562 = vunpack.c.0.s8 %v1561
        %v1563 = vperm.slane %v1555, %v1562
        %v1564 = vrot.slane %v1559, 4
        %v1565 = vsel %vm673, %v1564, %v1547
        %v1566 = vrot.slane %v1547, 4
        %v1567 = vsel %vm673, %v1559, %v1566
        %v1568 = vrot.slane %v1563, 4
        %v1569 = vsel %vm673, %v1568, %v1551
        %v1570 = vrot.slane %v1551, 4
        %v1571 = vsel %vm673, %v1563, %v1570
        %v1572 = vrot.slane %v1302, 4
        %v1573 = vsel %vm673, %v1572, %v1300
        %v1575 = vunpack.c.l.s4 1983009808
        %v1576 = vunpack.c.0.s8 %v1575
        %v1577 = vperm.slane %v1573, %v1576
        %v1578 = vrot.slane %v1303, 4
        %v1579 = vsel %vm673, %v1578, %v1301
        %v1581 = vunpack.c.l.s4 1983009808
        %v1582 = vunpack.c.0.s8 %v1581
        %v1583 = vperm.slane %v1579, %v1582
        %v1584 = vrot.slane %v1306, 4
        %v1585 = vsel %vm673, %v1584, %v1304
        %v1587 = vunpack.c.l.s4 1983009808
        %v1588 = vunpack.c.0.s8 %v1587
        %v1589 = vperm.slane %v1585, %v1588
        %v1590 = vrot.slane %v1307, 4
        %v1591 = vsel %vm673, %v1590, %v1305
        %v1593 = vunpack.c.l.s4 1983009808
        %v1594 = vunpack.c.0.s8 %v1593
        %v1595 = vperm.slane %v1591, %v1594
        %v1596 = vrot.slane %v1583, 4
        %v1597 = vsel %vm673, %v1596, %v1577
        %v1598 = vrot.slane %v1577, 4
        %v1599 = vsel %vm673, %v1583, %v1598
        %v1601 = vunpack.c.l.s4 1934713408
        %v1602 = vunpack.c.0.s8 %v1601
        %v1603 = vperm.slane %v1597, %v1602
        %v1605 = vunpack.c.l.s4 1934713408
        %v1606 = vunpack.c.0.s8 %v1605
        %v1607 = vperm.slane %v1599, %v1606
        %v1608 = vrot.slane %v1595, 4
        %v1609 = vsel %vm673, %v1608, %v1589
        %v1610 = vrot.slane %v1589, 4
        %v1611 = vsel %vm673, %v1595, %v1610
        %v1613 = vunpack.c.l.s4 1934713408
        %v1614 = vunpack.c.0.s8 %v1613
        %v1615 = vperm.slane %v1609, %v1614
        %v1617 = vunpack.c.l.s4 1934713408
        %v1618 = vunpack.c.0.s8 %v1617
        %v1619 = vperm.slane %v1611, %v1618
        %v1620 = vrot.slane %v1615, 4
        %v1621 = vsel %vm673, %v1620, %v1603
        %v1622 = vrot.slane %v1603, 4
        %v1623 = vsel %vm673, %v1615, %v1622
        %v1624 = vrot.slane %v1619, 4
        %v1625 = vsel %vm673, %v1624, %v1607
        %v1626 = vrot.slane %v1607, 4
        %v1627 = vsel %vm673, %v1619, %v1626
        %v1628 = vpack.c.bf16 %v1565, %v1565
        %v1629 = vpack.c.bf16 %v1567, %v1567
        %v1630 = vpack.c.bf16 %v1569, %v1569
        %v1631 = vpack.c.bf16 %v1571, %v1571
        %v1632 = vpack.c.bf16 %v1621, %v1621
        %v1633 = vpack.c.bf16 %v1623, %v1623
        %v1634 = vpack.c.bf16 %v1625, %v1625
        %v1635 = vpack.c.bf16 %v1627, %v1627
        %v1636 = vrot.slane %v1502, 4
        %v1637 = vsel %vm673, %v1636, %v1500
        %v1639 = vunpack.c.l.s4 1983009808
        %v1640 = vunpack.c.0.s8 %v1639
        %v1641 = vperm.slane %v1637, %v1640
        %v1642 = vrot.slane %v1503, 4
        %v1643 = vsel %vm673, %v1642, %v1501
        %v1645 = vunpack.c.l.s4 1983009808
        %v1646 = vunpack.c.0.s8 %v1645
        %v1647 = vperm.slane %v1643, %v1646
        %v1648 = vrot.slane %v1506, 4
        %v1649 = vsel %vm673, %v1648, %v1504
        %v1651 = vunpack.c.l.s4 1983009808
        %v1652 = vunpack.c.0.s8 %v1651
        %v1653 = vperm.slane %v1649, %v1652
        %v1654 = vrot.slane %v1507, 4
        %v1655 = vsel %vm673, %v1654, %v1505
        %v1657 = vunpack.c.l.s4 1983009808
        %v1658 = vunpack.c.0.s8 %v1657
        %v1659 = vperm.slane %v1655, %v1658
        %v1660 = vrot.slane %v1647, 4
        %v1661 = vsel %vm673, %v1660, %v1641
        %v1662 = vrot.slane %v1641, 4
        %v1663 = vsel %vm673, %v1647, %v1662
        %v1665 = vunpack.c.l.s4 1934713408
        %v1666 = vunpack.c.0.s8 %v1665
        %v1667 = vperm.slane %v1661, %v1666
        %v1669 = vunpack.c.l.s4 1934713408
        %v1670 = vunpack.c.0.s8 %v1669
        %v1671 = vperm.slane %v1663, %v1670
        %v1672 = vrot.slane %v1659, 4
        %v1673 = vsel %vm673, %v1672, %v1653
        %v1674 = vrot.slane %v1653, 4
        %v1675 = vsel %vm673, %v1659, %v1674
        %v1677 = vunpack.c.l.s4 1934713408
        %v1678 = vunpack.c.0.s8 %v1677
        %v1679 = vperm.slane %v1673, %v1678
        %v1681 = vunpack.c.l.s4 1934713408
        %v1682 = vunpack.c.0.s8 %v1681
        %v1683 = vperm.slane %v1675, %v1682
        %v1684 = vrot.slane %v1679, 4
        %v1685 = vsel %vm673, %v1684, %v1667
        %v1686 = vrot.slane %v1667, 4
        %v1687 = vsel %vm673, %v1679, %v1686
        %v1688 = vrot.slane %v1683, 4
        %v1689 = vsel %vm673, %v1688, %v1671
        %v1690 = vrot.slane %v1671, 4
        %v1691 = vsel %vm673, %v1683, %v1690
        %v1692 = vrot.slane %v1510, 4
        %v1693 = vsel %vm673, %v1692, %v1508
        %v1695 = vunpack.c.l.s4 1983009808
        %v1696 = vunpack.c.0.s8 %v1695
        %v1697 = vperm.slane %v1693, %v1696
        %v1698 = vrot.slane %v1511, 4
        %v1699 = vsel %vm673, %v1698, %v1509
        %v1701 = vunpack.c.l.s4 1983009808
        %v1702 = vunpack.c.0.s8 %v1701
        %v1703 = vperm.slane %v1699, %v1702
        %v1704 = vrot.slane %v1514, 4
        %v1705 = vsel %vm673, %v1704, %v1512
        %v1707 = vunpack.c.l.s4 1983009808
        %v1708 = vunpack.c.0.s8 %v1707
        %v1709 = vperm.slane %v1705, %v1708
        %v1710 = vrot.slane %v1515, 4
        %v1711 = vsel %vm673, %v1710, %v1513
        %v1713 = vunpack.c.l.s4 1983009808
        %v1714 = vunpack.c.0.s8 %v1713
        %v1715 = vperm.slane %v1711, %v1714
        %v1716 = vrot.slane %v1703, 4
        %v1717 = vsel %vm673, %v1716, %v1697
        %v1718 = vrot.slane %v1697, 4
        %v1719 = vsel %vm673, %v1703, %v1718
        %v1721 = vunpack.c.l.s4 1934713408
        %v1722 = vunpack.c.0.s8 %v1721
        %v1723 = vperm.slane %v1717, %v1722
        %v1725 = vunpack.c.l.s4 1934713408
        %v1726 = vunpack.c.0.s8 %v1725
        %v1727 = vperm.slane %v1719, %v1726
        %v1728 = vrot.slane %v1715, 4
        %v1729 = vsel %vm673, %v1728, %v1709
        %v1730 = vrot.slane %v1709, 4
        %v1731 = vsel %vm673, %v1715, %v1730
        %v1733 = vunpack.c.l.s4 1934713408
        %v1734 = vunpack.c.0.s8 %v1733
        %v1735 = vperm.slane %v1729, %v1734
        %v1737 = vunpack.c.l.s4 1934713408
        %v1738 = vunpack.c.0.s8 %v1737
        %v1739 = vperm.slane %v1731, %v1738
        %v1740 = vrot.slane %v1735, 4
        %v1741 = vsel %vm673, %v1740, %v1723
        %v1742 = vrot.slane %v1723, 4
        %v1743 = vsel %vm673, %v1735, %v1742
        %v1744 = vrot.slane %v1739, 4
        %v1745 = vsel %vm673, %v1744, %v1727
        %v1746 = vrot.slane %v1727, 4
        %v1747 = vsel %vm673, %v1739, %v1746
        %v1748 = vpack.c.bf16 %v1685, %v1685
        %v1749 = vpack.c.bf16 %v1687, %v1687
        %v1750 = vpack.c.bf16 %v1689, %v1689
        %v1751 = vpack.c.bf16 %v1691, %v1691
        %v1752 = vpack.c.bf16 %v1741, %v1741
        %v1753 = vpack.c.bf16 %v1743, %v1743
        %v1754 = vpack.c.bf16 %v1745, %v1745
        %v1755 = vpack.c.bf16 %v1747, %v1747
        %v1756 = vsel %vm673, %v987, %v968
        %v1758 = vunpack.c.l.s4 1983009808
        %v1759 = vunpack.c.0.s8 %v1758
        %v1760 = vperm.slane %v1756, %v1759
        %v1761 = vrot.slane %v988, 4
        %v1762 = vsel %vm673, %v1761, %v986
        %v1764 = vunpack.c.l.s4 1983009808
        %v1765 = vunpack.c.0.s8 %v1764
        %v1766 = vperm.slane %v1762, %v1765
        %v1767 = vsel %vm673, %v991, %v980
        %v1769 = vunpack.c.l.s4 1983009808
        %v1770 = vunpack.c.0.s8 %v1769
        %v1771 = vperm.slane %v1767, %v1770
        %v1772 = vrot.slane %v992, 4
        %v1773 = vsel %vm673, %v1772, %v990
        %v1775 = vunpack.c.l.s4 1983009808
        %v1776 = vunpack.c.0.s8 %v1775
        %v1777 = vperm.slane %v1773, %v1776
        %v1778 = vrot.slane %v1766, 4
        %v1779 = vsel %vm673, %v1778, %v1760
        %v1780 = vrot.slane %v1760, 4
        %v1781 = vsel %vm673, %v1766, %v1780
        %v1783 = vunpack.c.l.s4 1934713408
        %v1784 = vunpack.c.0.s8 %v1783
        %v1785 = vperm.slane %v1779, %v1784
        %v1787 = vunpack.c.l.s4 1934713408
        %v1788 = vunpack.c.0.s8 %v1787
        %v1789 = vperm.slane %v1781, %v1788
        %v1790 = vrot.slane %v1777, 4
        %v1791 = vsel %vm673, %v1790, %v1771
        %v1792 = vrot.slane %v1771, 4
        %v1793 = vsel %vm673, %v1777, %v1792
        %v1795 = vunpack.c.l.s4 1934713408
        %v1796 = vunpack.c.0.s8 %v1795
        %v1797 = vperm.slane %v1791, %v1796
        %v1799 = vunpack.c.l.s4 1934713408
        %v1800 = vunpack.c.0.s8 %v1799
        %v1801 = vperm.slane %v1793, %v1800
        %v1802 = vrot.slane %v1797, 4
        %v1803 = vsel %vm673, %v1802, %v1785
        %v1804 = vrot.slane %v1785, 4
        %v1805 = vsel %vm673, %v1797, %v1804
        %v1806 = vrot.slane %v1801, 4
        %v1807 = vsel %vm673, %v1806, %v1789
        %v1808 = vrot.slane %v1789, 4
        %v1809 = vsel %vm673, %v1801, %v1808
        %v1810 = vsel %vm673, %v1043, %v1024
        %v1812 = vunpack.c.l.s4 1983009808
        %v1813 = vunpack.c.0.s8 %v1812
        %v1814 = vperm.slane %v1810, %v1813
        %v1815 = vrot.slane %v1044, 4
        %v1816 = vsel %vm673, %v1815, %v1042
        %v1818 = vunpack.c.l.s4 1983009808
        %v1819 = vunpack.c.0.s8 %v1818
        %v1820 = vperm.slane %v1816, %v1819
        %v1821 = vsel %vm673, %v1047, %v1036
        %v1823 = vunpack.c.l.s4 1983009808
        %v1824 = vunpack.c.0.s8 %v1823
        %v1825 = vperm.slane %v1821, %v1824
        %v1826 = vrot.slane %v1048, 4
        %v1827 = vsel %vm673, %v1826, %v1046
        %v1829 = vunpack.c.l.s4 1983009808
        %v1830 = vunpack.c.0.s8 %v1829
        %v1831 = vperm.slane %v1827, %v1830
        %v1832 = vrot.slane %v1820, 4
        %v1833 = vsel %vm673, %v1832, %v1814
        %v1834 = vrot.slane %v1814, 4
        %v1835 = vsel %vm673, %v1820, %v1834
        %v1837 = vunpack.c.l.s4 1934713408
        %v1838 = vunpack.c.0.s8 %v1837
        %v1839 = vperm.slane %v1833, %v1838
        %v1841 = vunpack.c.l.s4 1934713408
        %v1842 = vunpack.c.0.s8 %v1841
        %v1843 = vperm.slane %v1835, %v1842
        %v1844 = vrot.slane %v1831, 4
        %v1845 = vsel %vm673, %v1844, %v1825
        %v1846 = vrot.slane %v1825, 4
        %v1847 = vsel %vm673, %v1831, %v1846
        %v1849 = vunpack.c.l.s4 1934713408
        %v1850 = vunpack.c.0.s8 %v1849
        %v1851 = vperm.slane %v1845, %v1850
        %v1853 = vunpack.c.l.s4 1934713408
        %v1854 = vunpack.c.0.s8 %v1853
        %v1855 = vperm.slane %v1847, %v1854
        %v1856 = vrot.slane %v1851, 4
        %v1857 = vsel %vm673, %v1856, %v1839
        %v1858 = vrot.slane %v1839, 4
        %v1859 = vsel %vm673, %v1851, %v1858
        %v1860 = vrot.slane %v1855, 4
        %v1861 = vsel %vm673, %v1860, %v1843
        %v1862 = vrot.slane %v1843, 4
        %v1863 = vsel %vm673, %v1855, %v1862
        %v1864 = vpack.c.bf16 %v1803, %v1803
        %v1865 = vpack.c.bf16 %v1805, %v1805
        %v1866 = vpack.c.bf16 %v1807, %v1807
        %v1867 = vpack.c.bf16 %v1809, %v1809
        %v1868 = vpack.c.bf16 %v1857, %v1857
        %v1869 = vpack.c.bf16 %v1859, %v1859
        %v1870 = vpack.c.bf16 %v1861, %v1861
        %v1871 = vpack.c.bf16 %v1863, %v1863
        %vm1872 = vcmask 64512
        %v1874 = vsel %vm1872, %v1628, 0
        %v1877 = vsel %vm1872, %v1748, 0
        %1879 = vmatpush.bf16.xpose.msra.mxu0 0
        %1880 = vmatpush.bf16.xpose.msra.mxu0 0
        %1881 = vmatpush.bf16.xpose.msra.mxu0 0
        %1882 = vmatpush.bf16.xpose.msra.mxu0 0
        %1883 = vmatpush.bf16.xpose.msra.mxu0 0
        %1884 = vmatpush.bf16.xpose.msra.mxu0 0
        %1885 = vmatpush.bf16.xpose.msra.mxu0 0
        %1886 = vmatpush.bf16.xpose.msra.mxu0 %v1877
        %1887 = vmatmul.bf16.gmra.mxu0 %v1874
        %v1888 = vpop.f32.mrf.mxu0
        %v1889 = vadd.f32 0.0, %v1888
        %v1890 = vpop.f32.mrf.mxu0
        %1891 = vdwg.mxu0
        %v1893 = vsel %vm1872, %v1629, 0
        %v1896 = vsel %vm1872, %v1749, 0
        %1898 = vmatpush.bf16.xpose.msra.mxu0 0
        %1899 = vmatpush.bf16.xpose.msra.mxu0 0
        %1900 = vmatpush.bf16.xpose.msra.mxu0 0
        %1901 = vmatpush.bf16.xpose.msra.mxu0 0
        %1902 = vmatpush.bf16.xpose.msra.mxu0 0
        %1903 = vmatpush.bf16.xpose.msra.mxu0 0
        %1904 = vmatpush.bf16.xpose.msra.mxu0 0
        %1905 = vmatpush.bf16.xpose.msra.mxu0 %v1896
        %1906 = vmatmul.bf16.gmra.mxu0 %v1893
        %v1907 = vpop.f32.mrf.mxu0
        %v1908 = vadd.f32 0.0, %v1907
        %v1909 = vpop.f32.mrf.mxu0
        %1910 = vdwg.mxu0
        %v1912 = vsel %vm1872, %v1630, 0
        %v1915 = vsel %vm1872, %v1750, 0
        %1917 = vmatpush.bf16.xpose.msra.mxu0 0
        %1918 = vmatpush.bf16.xpose.msra.mxu0 0
        %1919 = vmatpush.bf16.xpose.msra.mxu0 0
        %1920 = vmatpush.bf16.xpose.msra.mxu0 0
        %1921 = vmatpush.bf16.xpose.msra.mxu0 0
        %1922 = vmatpush.bf16.xpose.msra.mxu0 0
        %1923 = vmatpush.bf16.xpose.msra.mxu0 0
        %1924 = vmatpush.bf16.xpose.msra.mxu0 %v1915
        %1925 = vmatmul.bf16.gmra.mxu0 %v1912
        %v1926 = vpop.f32.mrf.mxu0
        %v1927 = vadd.f32 0.0, %v1926
        %v1928 = vpop.f32.mrf.mxu0
        %1929 = vdwg.mxu0
        %v1931 = vsel %vm1872, %v1631, 0
        %v1934 = vsel %vm1872, %v1751, 0
        %1936 = vmatpush.bf16.xpose.msra.mxu0 0
        %1937 = vmatpush.bf16.xpose.msra.mxu0 0
        %1938 = vmatpush.bf16.xpose.msra.mxu0 0
        %1939 = vmatpush.bf16.xpose.msra.mxu0 0
        %1940 = vmatpush.bf16.xpose.msra.mxu0 0
        %1941 = vmatpush.bf16.xpose.msra.mxu0 0
        %1942 = vmatpush.bf16.xpose.msra.mxu0 0
        %1943 = vmatpush.bf16.xpose.msra.mxu0 %v1934
        %1944 = vmatmul.bf16.gmra.mxu0 %v1931
        %v1945 = vpop.f32.mrf.mxu0
        %v1946 = vadd.f32 0.0, %v1945
        %v1947 = vpop.f32.mrf.mxu0
        %1948 = vdwg.mxu0
        %v1950 = vsel %vm1872, %v1632, 0
        %v1953 = vsel %vm1872, %v1752, 0
        %1955 = vmatpush.bf16.xpose.msra.mxu0 0
        %1956 = vmatpush.bf16.xpose.msra.mxu0 0
        %1957 = vmatpush.bf16.xpose.msra.mxu0 0
        %1958 = vmatpush.bf16.xpose.msra.mxu0 0
        %1959 = vmatpush.bf16.xpose.msra.mxu0 0
        %1960 = vmatpush.bf16.xpose.msra.mxu0 0
        %1961 = vmatpush.bf16.xpose.msra.mxu0 0
        %1962 = vmatpush.bf16.xpose.msra.mxu0 %v1953
        %1963 = vmatmul.bf16.gmra.mxu0 %v1950
        %v1964 = vpop.f32.mrf.mxu0
        %v1965 = vadd.f32 0.0, %v1964
        %v1966 = vpop.f32.mrf.mxu0
        %1967 = vdwg.mxu0
        %v1969 = vsel %vm1872, %v1633, 0
        %v1972 = vsel %vm1872, %v1753, 0
        %1974 = vmatpush.bf16.xpose.msra.mxu0 0
        %1975 = vmatpush.bf16.xpose.msra.mxu0 0
        %1976 = vmatpush.bf16.xpose.msra.mxu0 0
        %1977 = vmatpush.bf16.xpose.msra.mxu0 0
        %1978 = vmatpush.bf16.xpose.msra.mxu0 0
        %1979 = vmatpush.bf16.xpose.msra.mxu0 0
        %1980 = vmatpush.bf16.xpose.msra.mxu0 0
        %1981 = vmatpush.bf16.xpose.msra.mxu0 %v1972
        %1982 = vmatmul.bf16.gmra.mxu0 %v1969
        %v1983 = vpop.f32.mrf.mxu0
        %v1984 = vadd.f32 0.0, %v1983
        %v1985 = vpop.f32.mrf.mxu0
        %1986 = vdwg.mxu0
        %v1988 = vsel %vm1872, %v1634, 0
        %v1991 = vsel %vm1872, %v1754, 0
        %1993 = vmatpush.bf16.xpose.msra.mxu0 0
        %1994 = vmatpush.bf16.xpose.msra.mxu0 0
        %1995 = vmatpush.bf16.xpose.msra.mxu0 0
        %1996 = vmatpush.bf16.xpose.msra.mxu0 0
        %1997 = vmatpush.bf16.xpose.msra.mxu0 0
        %1998 = vmatpush.bf16.xpose.msra.mxu0 0
        %1999 = vmatpush.bf16.xpose.msra.mxu0 0
        %2000 = vmatpush.bf16.xpose.msra.mxu0 %v1991
        %2001 = vmatmul.bf16.gmra.mxu0 %v1988
        %v2002 = vpop.f32.mrf.mxu0
        %v2003 = vadd.f32 0.0, %v2002
        %v2004 = vpop.f32.mrf.mxu0
        %2005 = vdwg.mxu0
        %v2007 = vsel %vm1872, %v1635, 0
        %v2010 = vsel %vm1872, %v1755, 0
        %2012 = vmatpush.bf16.xpose.msra.mxu0 0
        %2013 = vmatpush.bf16.xpose.msra.mxu0 0
        %2014 = vmatpush.bf16.xpose.msra.mxu0 0
        %2015 = vmatpush.bf16.xpose.msra.mxu0 0
        %2016 = vmatpush.bf16.xpose.msra.mxu0 0
        %2017 = vmatpush.bf16.xpose.msra.mxu0 0
        %2018 = vmatpush.bf16.xpose.msra.mxu0 0
        %2019 = vmatpush.bf16.xpose.msra.mxu0 %v2010
        %2020 = vmatmul.bf16.gmra.mxu0 %v2007
        %v2021 = vpop.f32.mrf.mxu0
        %v2022 = vadd.f32 0.0, %v2021
        %v2023 = vpop.f32.mrf.mxu0
        %2024 = vdwg.mxu0
        %v2025 = vmul.f32 %v1889, 0.35355338
        %v2026 = vmul.f32 %v1908, 0.35355338
        %v2027 = vmul.f32 %v1927, 0.35355338
        %v2028 = vmul.f32 %v1946, 0.35355338
        %v2029 = vmul.f32 %v1965, 0.35355338
        %v2030 = vmul.f32 %v1984, 0.35355338
        %v2031 = vmul.f32 %v2003, 0.35355338
        %v2032 = vmul.f32 %v2022, 0.35355338
        %v2033 = vlaneseq
        %v2034 = vshrl.u32 %v2033, 7
        %v2035 = vlaneseq
        %v2036 = vand.u32 %v2035, 127
        %vm2037 = vcmp.ge.s32.totalorder %v2034, %v2036
        %v2038 = vsel %vm2037, 0.0, -1e+30
        %v2039 = vadd.f32 %v2025, %v2038
        %v2040 = vadd.f32 %v2026, %v2038
        %v2041 = vadd.f32 %v2027, %v2038
        %v2042 = vadd.f32 %v2028, %v2038
        %v2043 = vadd.f32 %v2029, %v2038
        %v2044 = vadd.f32 %v2030, %v2038
        %v2045 = vadd.f32 %v2031, %v2038
        %v2046 = vadd.f32 %v2032, %v2038
        %v2047 = vsel %vm1872, %v2039, -inf
        %2048 = vmax.xlane.f32.xlu0 %v2047
        %v2049 = vpop.xlane.xlu0 %2048
        %v2050 = vsel %vm1872, %v2040, -inf
        %2051 = vmax.xlane.f32.xlu0 %v2050
        %v2052 = vpop.xlane.xlu0 %2051
        %v2053 = vsel %vm1872, %v2041, -inf
        %2054 = vmax.xlane.f32.xlu0 %v2053
        %v2055 = vpop.xlane.xlu0 %2054
        %v2056 = vsel %vm1872, %v2042, -inf
        %2057 = vmax.xlane.f32.xlu0 %v2056
        %v2058 = vpop.xlane.xlu0 %2057
        %v2059 = vsel %vm1872, %v2043, -inf
        %2060 = vmax.xlane.f32.xlu0 %v2059
        %v2061 = vpop.xlane.xlu0 %2060
        %v2062 = vsel %vm1872, %v2044, -inf
        %2063 = vmax.xlane.f32.xlu0 %v2062
        %v2064 = vpop.xlane.xlu0 %2063
        %v2065 = vsel %vm1872, %v2045, -inf
        %2066 = vmax.xlane.f32.xlu0 %v2065
        %v2067 = vpop.xlane.xlu0 %2066
        %v2068 = vsel %vm1872, %v2046, -inf
        %2069 = vmax.xlane.f32.xlu0 %v2068
        %v2070 = vpop.xlane.xlu0 %2069
        %v2071 = vsub.f32 %v2039, %v2049
        %v2072 = vsub.f32 %v2040, %v2052
        %v2073 = vsub.f32 %v2041, %v2055
        %v2074 = vsub.f32 %v2042, %v2058
        %v2075 = vsub.f32 %v2043, %v2061
        %v2076 = vsub.f32 %v2044, %v2064
        %v2077 = vsub.f32 %v2045, %v2067
        %v2078 = vsub.f32 %v2046, %v2070
        %v2079 = vmul.f32 %v2071, 1.442695
        %v2080 = vpow.pop %v2079
        %v2081 = vmul.f32 %v2072, 1.442695
        %v2082 = vpow.pop %v2081
        %v2083 = vmul.f32 %v2073, 1.442695
        %v2084 = vpow.pop %v2083
        %v2085 = vmul.f32 %v2074, 1.442695
        %v2086 = vpow.pop %v2085
        %v2087 = vmul.f32 %v2075, 1.442695
        %v2088 = vpow.pop %v2087
        %v2089 = vmul.f32 %v2076, 1.442695
        %v2090 = vpow.pop %v2089
        %v2091 = vmul.f32 %v2077, 1.442695
        %v2092 = vpow.pop %v2091
        %v2093 = vmul.f32 %v2078, 1.442695
        %v2094 = vpow.pop %v2093
        %v2095 = vsel %vm1872, %v2080, 0.0
        %2096 = vadd.xlane.f32.xlu0 %v2095
        %v2097 = vpop.xlane.xlu0 %2096
        %v2098 = vsel %vm1872, %v2082, 0.0
        %2099 = vadd.xlane.f32.xlu0 %v2098
        %v2100 = vpop.xlane.xlu0 %2099
        %v2101 = vsel %vm1872, %v2084, 0.0
        %2102 = vadd.xlane.f32.xlu0 %v2101
        %v2103 = vpop.xlane.xlu0 %2102
        %v2104 = vsel %vm1872, %v2086, 0.0
        %2105 = vadd.xlane.f32.xlu0 %v2104
        %v2106 = vpop.xlane.xlu0 %2105
        %v2107 = vsel %vm1872, %v2088, 0.0
        %2108 = vadd.xlane.f32.xlu0 %v2107
        %v2109 = vpop.xlane.xlu0 %2108
        %v2110 = vsel %vm1872, %v2090, 0.0
        %2111 = vadd.xlane.f32.xlu0 %v2110
        %v2112 = vpop.xlane.xlu0 %2111
        %v2113 = vsel %vm1872, %v2092, 0.0
        %2114 = vadd.xlane.f32.xlu0 %v2113
        %v2115 = vpop.xlane.xlu0 %2114
        %v2116 = vsel %vm1872, %v2094, 0.0
        %2117 = vadd.xlane.f32.xlu0 %v2116
        %v2118 = vpop.xlane.xlu0 %2117
        %v2119 = vrcp.pop %v2097
        %v2120 = vrcp.pop %v2100
        %v2121 = vrcp.pop %v2103
        %v2122 = vrcp.pop %v2106
        %v2123 = vrcp.pop %v2109
        %v2124 = vrcp.pop %v2112
        %v2125 = vrcp.pop %v2115
        %v2126 = vrcp.pop %v2118
        %v2127 = vmul.f32 %v2080, %v2119
        %v2128 = vmul.f32 %v2082, %v2120
        %v2129 = vmul.f32 %v2084, %v2121
        %v2130 = vmul.f32 %v2086, %v2122
        %v2131 = vmul.f32 %v2088, %v2123
        %v2132 = vmul.f32 %v2090, %v2124
        %v2133 = vmul.f32 %v2092, %v2125
        %v2134 = vmul.f32 %v2094, %v2126
        %v2135 = vpack.c.bf16 %v2127, %v2127
        %v2136 = vpack.c.bf16 %v2128, %v2128
        %v2137 = vpack.c.bf16 %v2129, %v2129
        %v2138 = vpack.c.bf16 %v2130, %v2130
        %v2139 = vpack.c.bf16 %v2131, %v2131
        %v2140 = vpack.c.bf16 %v2132, %v2132
        %v2141 = vpack.c.bf16 %v2133, %v2133
        %v2142 = vpack.c.bf16 %v2134, %v2134
        %v2144 = vsel %vm1872, %v2135, 0
        %vm2146 = vcmask 1043456
        %v2148 = vsel %vm2146, %v1864, 0
        %2150 = vmatpush.bf16.msra.mxu0 0
        %2151 = vmatpush.bf16.msra.mxu0 0
        %2152 = vmatpush.bf16.msra.mxu0 0
        %2153 = vmatpush.bf16.msra.mxu0 0
        %2154 = vmatpush.bf16.msra.mxu0 0
        %2155 = vmatpush.bf16.msra.mxu0 0
        %2156 = vmatpush.bf16.msra.mxu0 0
        %2157 = vmatpush.bf16.msra.mxu0 %v2148
        %2158 = vmatmul.bf16.gmra.mxu0 %v2144
        %v2159 = vpop.f32.mrf.mxu0
        %v2160 = vadd.f32 0.0, %v2159
        %v2161 = vpop.f32.mrf.mxu0
        %2162 = vdwg.mxu0
        %v2164 = vsel %vm1872, %v2136, 0
        %v2167 = vsel %vm2146, %v1865, 0
        %2169 = vmatpush.bf16.msra.mxu0 0
        %2170 = vmatpush.bf16.msra.mxu0 0
        %2171 = vmatpush.bf16.msra.mxu0 0
        %2172 = vmatpush.bf16.msra.mxu0 0
        %2173 = vmatpush.bf16.msra.mxu0 0
        %2174 = vmatpush.bf16.msra.mxu0 0
        %2175 = vmatpush.bf16.msra.mxu0 0
        %2176 = vmatpush.bf16.msra.mxu0 %v2167
        %2177 = vmatmul.bf16.gmra.mxu0 %v2164
        %v2178 = vpop.f32.mrf.mxu0
        %v2179 = vadd.f32 0.0, %v2178
        %v2180 = vpop.f32.mrf.mxu0
        %2181 = vdwg.mxu0
        %v2183 = vsel %vm1872, %v2137, 0
        %v2186 = vsel %vm2146, %v1866, 0
        %2188 = vmatpush.bf16.msra.mxu0 0
        %2189 = vmatpush.bf16.msra.mxu0 0
        %2190 = vmatpush.bf16.msra.mxu0 0
        %2191 = vmatpush.bf16.msra.mxu0 0
        %2192 = vmatpush.bf16.msra.mxu0 0
        %2193 = vmatpush.bf16.msra.mxu0 0
        %2194 = vmatpush.bf16.msra.mxu0 0
        %2195 = vmatpush.bf16.msra.mxu0 %v2186
        %2196 = vmatmul.bf16.gmra.mxu0 %v2183
        %v2197 = vpop.f32.mrf.mxu0
        %v2198 = vadd.f32 0.0, %v2197
        %v2199 = vpop.f32.mrf.mxu0
        %2200 = vdwg.mxu0
        %v2202 = vsel %vm1872, %v2138, 0
        %v2205 = vsel %vm2146, %v1867, 0
        %2207 = vmatpush.bf16.msra.mxu0 0
        %2208 = vmatpush.bf16.msra.mxu0 0
        %2209 = vmatpush.bf16.msra.mxu0 0
        %2210 = vmatpush.bf16.msra.mxu0 0
        %2211 = vmatpush.bf16.msra.mxu0 0
        %2212 = vmatpush.bf16.msra.mxu0 0
        %2213 = vmatpush.bf16.msra.mxu0 0
        %2214 = vmatpush.bf16.msra.mxu0 %v2205
        %2215 = vmatmul.bf16.gmra.mxu0 %v2202
        %v2216 = vpop.f32.mrf.mxu0
        %v2217 = vadd.f32 0.0, %v2216
        %v2218 = vpop.f32.mrf.mxu0
        %2219 = vdwg.mxu0
        %v2221 = vsel %vm1872, %v2139, 0
        %v2224 = vsel %vm2146, %v1868, 0
        %2226 = vmatpush.bf16.msra.mxu0 0
        %2227 = vmatpush.bf16.msra.mxu0 0
        %2228 = vmatpush.bf16.msra.mxu0 0
        %2229 = vmatpush.bf16.msra.mxu0 0
        %2230 = vmatpush.bf16.msra.mxu0 0
        %2231 = vmatpush.bf16.msra.mxu0 0
        %2232 = vmatpush.bf16.msra.mxu0 0
        %2233 = vmatpush.bf16.msra.mxu0 %v2224
        %2234 = vmatmul.bf16.gmra.mxu0 %v2221
        %v2235 = vpop.f32.mrf.mxu0
        %v2236 = vadd.f32 0.0, %v2235
        %v2237 = vpop.f32.mrf.mxu0
        %2238 = vdwg.mxu0
        %v2240 = vsel %vm1872, %v2140, 0
        %v2243 = vsel %vm2146, %v1869, 0
        %2245 = vmatpush.bf16.msra.mxu0 0
        %2246 = vmatpush.bf16.msra.mxu0 0
        %2247 = vmatpush.bf16.msra.mxu0 0
        %2248 = vmatpush.bf16.msra.mxu0 0
        %2249 = vmatpush.bf16.msra.mxu0 0
        %2250 = vmatpush.bf16.msra.mxu0 0
        %2251 = vmatpush.bf16.msra.mxu0 0
        %2252 = vmatpush.bf16.msra.mxu0 %v2243
        %2253 = vmatmul.bf16.gmra.mxu0 %v2240
        %v2254 = vpop.f32.mrf.mxu0
        %v2255 = vadd.f32 0.0, %v2254
        %v2256 = vpop.f32.mrf.mxu0
        %2257 = vdwg.mxu0
        %v2259 = vsel %vm1872, %v2141, 0
        %v2262 = vsel %vm2146, %v1870, 0
        %2264 = vmatpush.bf16.msra.mxu0 0
        %2265 = vmatpush.bf16.msra.mxu0 0
        %2266 = vmatpush.bf16.msra.mxu0 0
        %2267 = vmatpush.bf16.msra.mxu0 0
        %2268 = vmatpush.bf16.msra.mxu0 0
        %2269 = vmatpush.bf16.msra.mxu0 0
        %2270 = vmatpush.bf16.msra.mxu0 0
        %2271 = vmatpush.bf16.msra.mxu0 %v2262
        %2272 = vmatmul.bf16.gmra.mxu0 %v2259
        %v2273 = vpop.f32.mrf.mxu0
        %v2274 = vadd.f32 0.0, %v2273
        %v2275 = vpop.f32.mrf.mxu0
        %2276 = vdwg.mxu0
        %v2278 = vsel %vm1872, %v2142, 0
        %v2281 = vsel %vm2146, %v1871, 0
        %2283 = vmatpush.bf16.msra.mxu0 0
        %2284 = vmatpush.bf16.msra.mxu0 0
        %2285 = vmatpush.bf16.msra.mxu0 0
        %2286 = vmatpush.bf16.msra.mxu0 0
        %2287 = vmatpush.bf16.msra.mxu0 0
        %2288 = vmatpush.bf16.msra.mxu0 0
        %2289 = vmatpush.bf16.msra.mxu0 0
        %2290 = vmatpush.bf16.msra.mxu0 %v2281
        %2291 = vmatmul.bf16.gmra.mxu0 %v2278
        %v2292 = vpop.f32.mrf.mxu0
        %v2293 = vadd.f32 0.0, %v2292
        %v2294 = vpop.f32.mrf.mxu0
        %2295 = vdwg.mxu0
        %v2296 = vrot.slane %v2198, 4
        %v2297 = vsel %vm673, %v2296, %v2160
        %v2298 = vrot.slane %v2160, 4
        %v2299 = vsel %vm673, %v2198, %v2298
        %v2301 = vunpack.c.l.s4 1983009808
        %v2302 = vunpack.c.0.s8 %v2301
        %v2303 = vperm.slane %v2297, %v2302
        %v2305 = vunpack.c.l.s4 1983009808
        %v2306 = vunpack.c.0.s8 %v2305
        %v2307 = vperm.slane %v2299, %v2306
        %v2308 = vrot.slane %v2217, 4
        %v2309 = vsel %vm673, %v2308, %v2179
        %v2310 = vrot.slane %v2179, 4
        %v2311 = vsel %vm673, %v2217, %v2310
        %v2313 = vunpack.c.l.s4 1983009808
        %v2314 = vunpack.c.0.s8 %v2313
        %v2315 = vperm.slane %v2309, %v2314
        %v2317 = vunpack.c.l.s4 1983009808
        %v2318 = vunpack.c.0.s8 %v2317
        %v2319 = vperm.slane %v2311, %v2318
        %v2320 = vrot.slane %v2315, 4
        %v2321 = vsel %vm673, %v2320, %v2303
        %v2322 = vrot.slane %v2303, 4
        %v2323 = vsel %vm673, %v2315, %v2322
        %v2325 = vunpack.c.l.s4 1934713408
        %v2326 = vunpack.c.0.s8 %v2325
        %v2327 = vperm.slane %v2321, %v2326
        %v2329 = vunpack.c.l.s4 1934713408
        %v2330 = vunpack.c.0.s8 %v2329
        %v2331 = vperm.slane %v2323, %v2330
        %v2332 = vrot.slane %v2319, 4
        %v2333 = vsel %vm673, %v2332, %v2307
        %v2334 = vrot.slane %v2307, 4
        %v2335 = vsel %vm673, %v2319, %v2334
        %v2337 = vunpack.c.l.s4 1934713408
        %v2338 = vunpack.c.0.s8 %v2337
        %v2339 = vperm.slane %v2333, %v2338
        %v2341 = vunpack.c.l.s4 1934713408
        %v2342 = vunpack.c.0.s8 %v2341
        %v2343 = vperm.slane %v2335, %v2342
        %v2344 = vrot.slane %v2327, 4
        %v2345 = vsel %vm673, 0.0, %v2344
        %v2346 = vrot.slane %v2331, 4
        %v2347 = vsel %vm673, 0.0, %v2346
        %v2348 = vrot.slane %v2339, 4
        %v2349 = vsel %vm673, 0.0, %v2348
        %v2350 = vrot.slane %v2343, 4
        %v2351 = vsel %vm673, 0.0, %v2350
        %v2352 = vrot.slane %v2274, 4
        %v2353 = vsel %vm673, %v2352, %v2236
        %v2354 = vrot.slane %v2236, 4
        %v2355 = vsel %vm673, %v2274, %v2354
        %v2357 = vunpack.c.l.s4 1983009808
        %v2358 = vunpack.c.0.s8 %v2357
        %v2359 = vperm.slane %v2353, %v2358
        %v2361 = vunpack.c.l.s4 1983009808
        %v2362 = vunpack.c.0.s8 %v2361
        %v2363 = vperm.slane %v2355, %v2362
        %v2364 = vrot.slane %v2293, 4
        %v2365 = vsel %vm673, %v2364, %v2255
        %v2366 = vrot.slane %v2255, 4
        %v2367 = vsel %vm673, %v2293, %v2366
        %v2369 = vunpack.c.l.s4 1983009808
        %v2370 = vunpack.c.0.s8 %v2369
        %v2371 = vperm.slane %v2365, %v2370
        %v2373 = vunpack.c.l.s4 1983009808
        %v2374 = vunpack.c.0.s8 %v2373
        %v2375 = vperm.slane %v2367, %v2374
        %v2376 = vrot.slane %v2371, 4
        %v2377 = vsel %vm673, %v2376, %v2359
        %v2378 = vrot.slane %v2359, 4
        %v2379 = vsel %vm673, %v2371, %v2378
        %v2381 = vunpack.c.l.s4 1934713408
        %v2382 = vunpack.c.0.s8 %v2381
        %v2383 = vperm.slane %v2377, %v2382
        %v2385 = vunpack.c.l.s4 1934713408
        %v2386 = vunpack.c.0.s8 %v2385
        %v2387 = vperm.slane %v2379, %v2386
        %v2388 = vrot.slane %v2375, 4
        %v2389 = vsel %vm673, %v2388, %v2363
        %v2390 = vrot.slane %v2363, 4
        %v2391 = vsel %vm673, %v2375, %v2390
        %v2393 = vunpack.c.l.s4 1934713408
        %v2394 = vunpack.c.0.s8 %v2393
        %v2395 = vperm.slane %v2389, %v2394
        %v2397 = vunpack.c.l.s4 1934713408
        %v2398 = vunpack.c.0.s8 %v2397
        %v2399 = vperm.slane %v2391, %v2398
        %v2400 = vrot.slane %v2383, 4
        %v2401 = vsel %vm673, 0.0, %v2400
        %v2402 = vrot.slane %v2387, 4
        %v2403 = vsel %vm673, 0.0, %v2402
        %v2404 = vrot.slane %v2395, 4
        %v2405 = vsel %vm673, 0.0, %v2404
        %v2406 = vrot.slane %v2399, 4
        %v2407 = vsel %vm673, 0.0, %v2406
        %v2408 = vsel %vm673, %v2346, %v2327
        %v2410 = vunpack.c.l.s4 1983009808
        %v2411 = vunpack.c.0.s8 %v2410
        %v2412 = vperm.slane %v2408, %v2411
        %v2413 = vrot.slane %v2347, 4
        %v2414 = vsel %vm673, %v2413, %v2345
        %v2416 = vunpack.c.l.s4 1983009808
        %v2417 = vunpack.c.0.s8 %v2416
        %v2418 = vperm.slane %v2414, %v2417
        %v2419 = vsel %vm673, %v2350, %v2339
        %v2421 = vunpack.c.l.s4 1983009808
        %v2422 = vunpack.c.0.s8 %v2421
        %v2423 = vperm.slane %v2419, %v2422
        %v2424 = vrot.slane %v2351, 4
        %v2425 = vsel %vm673, %v2424, %v2349
        %v2427 = vunpack.c.l.s4 1983009808
        %v2428 = vunpack.c.0.s8 %v2427
        %v2429 = vperm.slane %v2425, %v2428
        %v2430 = vrot.slane %v2418, 4
        %v2431 = vsel %vm673, %v2430, %v2412
        %v2432 = vrot.slane %v2412, 4
        %v2433 = vsel %vm673, %v2418, %v2432
        %v2435 = vunpack.c.l.s4 1934713408
        %v2436 = vunpack.c.0.s8 %v2435
        %v2437 = vperm.slane %v2431, %v2436
        %v2439 = vunpack.c.l.s4 1934713408
        %v2440 = vunpack.c.0.s8 %v2439
        %v2441 = vperm.slane %v2433, %v2440
        %v2442 = vrot.slane %v2429, 4
        %v2443 = vsel %vm673, %v2442, %v2423
        %v2444 = vrot.slane %v2423, 4
        %v2445 = vsel %vm673, %v2429, %v2444
        %v2447 = vunpack.c.l.s4 1934713408
        %v2448 = vunpack.c.0.s8 %v2447
        %v2449 = vperm.slane %v2443, %v2448
        %v2451 = vunpack.c.l.s4 1934713408
        %v2452 = vunpack.c.0.s8 %v2451
        %v2453 = vperm.slane %v2445, %v2452
        %v2454 = vrot.slane %v2449, 4
        %v2455 = vsel %vm673, %v2454, %v2437
        %v2456 = vrot.slane %v2437, 4
        %v2457 = vsel %vm673, %v2449, %v2456
        %v2458 = vrot.slane %v2453, 4
        %v2459 = vsel %vm673, %v2458, %v2441
        %v2460 = vrot.slane %v2441, 4
        %v2461 = vsel %vm673, %v2453, %v2460
        %v2462 = vsel %vm673, %v2402, %v2383
        %v2464 = vunpack.c.l.s4 1983009808
        %v2465 = vunpack.c.0.s8 %v2464
        %v2466 = vperm.slane %v2462, %v2465
        %v2467 = vrot.slane %v2403, 4
        %v2468 = vsel %vm673, %v2467, %v2401
        %v2470 = vunpack.c.l.s4 1983009808
        %v2471 = vunpack.c.0.s8 %v2470
        %v2472 = vperm.slane %v2468, %v2471
        %v2473 = vsel %vm673, %v2406, %v2395
        %v2475 = vunpack.c.l.s4 1983009808
        %v2476 = vunpack.c.0.s8 %v2475
        %v2477 = vperm.slane %v2473, %v2476
        %v2478 = vrot.slane %v2407, 4
        %v2479 = vsel %vm673, %v2478, %v2405
        %v2481 = vunpack.c.l.s4 1983009808
        %v2482 = vunpack.c.0.s8 %v2481
        %v2483 = vperm.slane %v2479, %v2482
        %v2484 = vrot.slane %v2472, 4
        %v2485 = vsel %vm673, %v2484, %v2466
        %v2486 = vrot.slane %v2466, 4
        %v2487 = vsel %vm673, %v2472, %v2486
        %v2489 = vunpack.c.l.s4 1934713408
        %v2490 = vunpack.c.0.s8 %v2489
        %v2491 = vperm.slane %v2485, %v2490
        %v2493 = vunpack.c.l.s4 1934713408
        %v2494 = vunpack.c.0.s8 %v2493
        %v2495 = vperm.slane %v2487, %v2494
        %v2496 = vrot.slane %v2483, 4
        %v2497 = vsel %vm673, %v2496, %v2477
        %v2498 = vrot.slane %v2477, 4
        %v2499 = vsel %vm673, %v2483, %v2498
        %v2501 = vunpack.c.l.s4 1934713408
        %v2502 = vunpack.c.0.s8 %v2501
        %v2503 = vperm.slane %v2497, %v2502
        %v2505 = vunpack.c.l.s4 1934713408
        %v2506 = vunpack.c.0.s8 %v2505
        %v2507 = vperm.slane %v2499, %v2506
        %v2508 = vrot.slane %v2503, 4
        %v2509 = vsel %vm673, %v2508, %v2491
        %v2510 = vrot.slane %v2491, 4
        %v2511 = vsel %vm673, %v2503, %v2510
        %v2512 = vrot.slane %v2507, 4
        %v2513 = vsel %vm673, %v2512, %v2495
        %v2514 = vrot.slane %v2495, 4
        %v2515 = vsel %vm673, %v2507, %v2514
        %2518 = vrot.lane.b32.xlu0 %v2457, 8
        %v2519 = vpop.permute.xlu0 %2518
        %2520 = vrot.lane.b32.xlu0 %v2511, 8
        %v2521 = vpop.permute.xlu0 %2520
        %2526 = vrot.lane.b32.xlu0 %v2459, 16
        %v2527 = vpop.permute.xlu0 %2526
        %2528 = vrot.lane.b32.xlu0 %v2513, 16
        %v2529 = vpop.permute.xlu0 %2528
        %2534 = vrot.lane.b32.xlu0 %v2461, 24
        %v2535 = vpop.permute.xlu0 %2534
        %2536 = vrot.lane.b32.xlu0 %v2515, 24
        %v2537 = vpop.permute.xlu0 %2536
        %v2540 = vsel %vm1872, %v2455, %v2519
        %v2541 = vsel %vm1872, %v2509, %v2521
        %vm2542 = vcmask 130048
        %v2543 = vsel %vm2542, %v2540, %v2527
        %v2544 = vsel %vm2542, %v2541, %v2529
        %vm2545 = vcmask 195584
        %v2546 = vsel %vm2545, %v2543, %v2535
        %v2547 = vsel %vm2545, %v2544, %v2537
        %v2548 = vpack.c.bf16 %v2547, %v2546
        %v2549 = vld [vmem:[%s472] sm:$0xf]
        %v2550 = vld [vmem:[%s472 + $0x4] sm:$0xf]
        %v2551 = vld [vmem:[%s472 + $0x8] sm:$0xf]
        %v2552 = vld [vmem:[%s472 + $0xc] sm:$0xf]
        %v2553 = vperm.slane %v493, 5
        %v2558 = vunpack.c.l.b16 %v2549
        %v2559 = vunpack.c.l.b16 %v2550
        %v2560 = vunpack.c.l.b16 %v2551
        %v2561 = vunpack.c.l.b16 %v2552
        %v2562 = vpack.c.b16 %v2559, %v2558
        %v2563 = vpack.c.b16 %v2561, %v2560
        %v2567 = vsel %vm497, %v2548, 0
        %2569 = vmatpush.bf16.msra.mxu0 0
        %2570 = vmatpush.bf16.msra.mxu0 0
        %2571 = vmatpush.bf16.msra.mxu0 0
        %2572 = vmatpush.bf16.msra.mxu0 0
        %2573 = vmatpush.bf16.msra.mxu0 0
        %2574 = vmatpush.bf16.msra.mxu0 0
        %2575 = vmatpush.bf16.msra.mxu0 %v2563
        %2576 = vmatpush.bf16.msra.mxu0 %v2562
        %2577 = vmatmul.bf16.gmra.mxu0 %v2567
        %v2578 = vpop.f32.mrf.mxu0
        %v2579 = vadd.f32 %v2553, %v2578
        %v2580 = vpop.f32.mrf.mxu0
        %v2581 = vadd.f32 %v2553, %v2580
        %2582 = vdwg.mxu0
        %v2583 = vadd.f32 %v495, %v2579
        %v2584 = vadd.f32 %v496, %v2581
        %v2585 = vsel %vm497, %v2583, 0.0
        %2586 = vadd.xlane.f32.xlu0 %v2585
        %v2587 = vpop.xlane.xlu0 %2586
        %v2588 = vsel %vm497, %v2584, 0.0
        %2589 = vadd.xlane.f32.xlu0 %v2588
        %v2590 = vpop.xlane.xlu0 %2589
        %v2591 = vmul.f32 %v2587, %v510
        %v2592 = vmul.f32 %v2590, %v510
        %v2593 = vsub.f32 %v2583, %v2591
        %v2594 = vsub.f32 %v2584, %v2592
        %v2595 = vmul.f32 %v2593, %v2593
        %v2596 = vmul.f32 %v2594, %v2594
        %v2597 = vsel %vm497, %v2595, 0.0
        %2598 = vadd.xlane.f32.xlu0 %v2597
        %v2599 = vpop.xlane.xlu0 %2598
        %v2600 = vsel %vm497, %v2596, 0.0
        %2601 = vadd.xlane.f32.xlu0 %v2600
        %v2602 = vpop.xlane.xlu0 %2601
        %v2603 = vmul.f32 %v2599, %v510
        %v2604 = vmul.f32 %v2602, %v510
        %v2605 = vadd.f32 %v2603, 1e-05
        %v2606 = vadd.f32 %v2604, 1e-05
        %v2607 = vrsqrt.pop %v2605
        %v2608 = vmul.f32 %v2607, %v2605
        %v2609 = vmul.f32 %v2608, %v2607
        %v2610 = vmul.f32 0.5, %v2609
        %v2611 = vsub.f32 1.5, %v2610
        %v2612 = vmul.f32 %v2607, %v2611
        %vm2613 = vweird.f32 %v2605
        %vm2614 = vweird.f32 %v2607
        %vm2615 = vmor %vm2613, %vm2614
        %v2616 = vsel %vm2615, %v2607, %v2612
        %v2617 = vrsqrt.pop %v2606
        %v2618 = vmul.f32 %v2617, %v2606
        %v2619 = vmul.f32 %v2618, %v2617
        %v2620 = vmul.f32 0.5, %v2619
        %v2621 = vsub.f32 1.5, %v2620
        %v2622 = vmul.f32 %v2617, %v2621
        %vm2623 = vweird.f32 %v2606
        %vm2624 = vweird.f32 %v2617
        %vm2625 = vmor %vm2623, %vm2624
        %v2626 = vsel %vm2625, %v2617, %v2622
        %v2627 = vmul.f32 %v2593, %v2616
        %v2628 = vmul.f32 %v2594, %v2626
        %v2629 = vperm.slane %v493, 6
        %v2630 = vmul.f32 %v2627, %v2629
        %v2631 = vmul.f32 %v2628, %v2629
        %v2632 = vperm.slane %v493, 7
        %v2633 = vadd.f32 %v2630, %v2632
        %v2634 = vadd.f32 %v2631, %v2632
        %v2635 = vpack.c.bf16 %v2634, %v2633
        %v2636 = vld [vmem:[%s477] sm:$0xf]
        %v2637 = vld [vmem:[%s477 + $0x4] sm:$0xf]
        %v2638 = vld [vmem:[%s477 + $0x8] sm:$0xf]
        %v2639 = vld [vmem:[%s477 + $0xc] sm:$0xf]
        %v2640 = vperm.slane %v494, 0
        %v2645 = vunpack.c.l.b16 %v2636
        %v2646 = vunpack.c.l.b16 %v2637
        %v2647 = vunpack.c.l.b16 %v2638
        %v2648 = vunpack.c.l.b16 %v2639
        %v2649 = vpack.c.b16 %v2646, %v2645
        %v2650 = vpack.c.b16 %v2648, %v2647
        %v2654 = vsel %vm497, %v2635, 0
        %2656 = vmatpush.bf16.msra.mxu0 0
        %2657 = vmatpush.bf16.msra.mxu0 0
        %2658 = vmatpush.bf16.msra.mxu0 0
        %2659 = vmatpush.bf16.msra.mxu0 0
        %2660 = vmatpush.bf16.msra.mxu0 0
        %2661 = vmatpush.bf16.msra.mxu0 0
        %2662 = vmatpush.bf16.msra.mxu0 %v2650
        %2663 = vmatpush.bf16.msra.mxu0 %v2649
        %2664 = vmatmul.bf16.gmra.mxu0 %v2654
        %v2665 = vpop.f32.mrf.mxu0
        %v2666 = vadd.f32 %v2640, %v2665
        %v2667 = vpop.f32.mrf.mxu0
        %v2668 = vadd.f32 %v2640, %v2667
        %2669 = vdwg.mxu0
        %v2670 = vmul.f32 %v2666, %v2666
        %v2671 = vmul.f32 %v2668, %v2668
        %v2672 = vmul.f32 %v2666, %v2670
        %v2673 = vmul.f32 %v2668, %v2671
        %v2674 = vmul.f32 %v2672, 0.044715
        %v2675 = vmul.f32 %v2673, 0.044715
        %v2676 = vadd.f32 %v2666, %v2674
        %v2677 = vadd.f32 %v2668, %v2675
        %v2678 = vmul.f32 %v2676, 0.7978846
        %v2679 = vmul.f32 %v2677, 0.7978846
        %v2680 = vtanh.pop %v2678
        %v2681 = vtanh.pop %v2679
        %v2682 = vadd.f32 %v2680, 1.0
        %v2683 = vadd.f32 %v2681, 1.0
        %v2684 = vmul.f32 %v2682, 0.5
        %v2685 = vmul.f32 %v2683, 0.5
        %v2686 = vmul.f32 %v2666, %v2684
        %v2687 = vmul.f32 %v2668, %v2685
        %v2688 = vpack.c.bf16 %v2687, %v2686
        %v2689 = vld [vmem:[%s482] sm:$0xf]
        %v2690 = vld [vmem:[%s482 + $0x4] sm:$0xf]
        %v2691 = vld [vmem:[%s482 + $0x8] sm:$0xf]
        %v2692 = vld [vmem:[%s482 + $0xc] sm:$0xf]
        %v2693 = vld [vmem:[%s482 + $0x10] sm:$0xf]
        %v2694 = vld [vmem:[%s482 + $0x14] sm:$0xf]
        %v2695 = vld [vmem:[%s482 + $0x18] sm:$0xf]
        %v2696 = vld [vmem:[%s482 + $0x1c] sm:$0xf]
        %v2697 = vld [vmem:[%s482 + $0x20] sm:$0xf]
        %v2698 = vld [vmem:[%s482 + $0x24] sm:$0xf]
        %v2699 = vld [vmem:[%s482 + $0x28] sm:$0xf]
        %v2700 = vld [vmem:[%s482 + $0x2c] sm:$0xf]
        %v2701 = vld [vmem:[%s482 + $0x30] sm:$0xf]
        %v2702 = vld [vmem:[%s482 + $0x34] sm:$0xf]
        %v2703 = vld [vmem:[%s482 + $0x38] sm:$0xf]
        %v2704 = vld [vmem:[%s482 + $0x3c] sm:$0xf]
        %v2705 = vperm.slane %v494, 1
        %v2722 = vunpack.c.l.b16 %v2689
        %v2723 = vunpack.c.l.b16 %v2690
        %v2724 = vunpack.c.l.b16 %v2691
        %v2725 = vunpack.c.l.b16 %v2692
        %v2726 = vunpack.c.l.b16 %v2693
        %v2727 = vunpack.c.l.b16 %v2694
        %v2728 = vunpack.c.l.b16 %v2695
        %v2729 = vunpack.c.l.b16 %v2696
        %v2730 = vunpack.c.l.b16 %v2697
        %v2731 = vunpack.c.l.b16 %v2698
        %v2732 = vunpack.c.l.b16 %v2699
        %v2733 = vunpack.c.l.b16 %v2700
        %v2734 = vunpack.c.l.b16 %v2701
        %v2735 = vunpack.c.l.b16 %v2702
        %v2736 = vunpack.c.l.b16 %v2703
        %v2737 = vunpack.c.l.b16 %v2704
        %v2738 = vpack.c.b16 %v2723, %v2722
        %v2739 = vpack.c.b16 %v2725, %v2724
        %v2740 = vpack.c.b16 %v2727, %v2726
        %v2741 = vpack.c.b16 %v2729, %v2728
        %v2742 = vpack.c.b16 %v2731, %v2730
        %v2743 = vpack.c.b16 %v2733, %v2732
        %v2744 = vpack.c.b16 %v2735, %v2734
        %v2745 = vpack.c.b16 %v2737, %v2736
        %2754 = vmatpush.bf16.msra.mxu0 %v2745
        %2755 = vmatpush.bf16.msra.mxu0 %v2744
        %2756 = vmatpush.bf16.msra.mxu0 %v2743
        %2757 = vmatpush.bf16.msra.mxu0 %v2742
        %2758 = vmatpush.bf16.msra.mxu0 %v2741
        %2759 = vmatpush.bf16.msra.mxu0 %v2740
        %2760 = vmatpush.bf16.msra.mxu0 %v2739
        %2761 = vmatpush.bf16.msra.mxu0 %v2738
        %2762 = vmatmul.bf16.gmra.mxu0 %v2688
        %v2763 = vpop.f32.mrf.mxu0
        %v2764 = vadd.f32 %v2705, %v2763
        %v2765 = vpop.f32.mrf.mxu0
        %v2766 = vadd.f32 %v2705, %v2765
        %2767 = vdwg.mxu0
        %v2768 = vadd.f32 %v2583, %v2764
        %v2769 = vadd.f32 %v2584, %v2766
        %2770 = vst.msk [vmem:[#allocation2] sm:$0xff] %vm497, %v2768
        %2771 = vst.msk [vmem:[#allocation2 + $0x8] sm:$0xff] %vm497, %v2769
        %p2772 = scmp.eq.s32.totalorder %s23, 1
        // Predicated region
        $region69: #{tpu_custom_call.1} parent=59 // pred_check
          %p2773 = pneg %p2772
        $region70: #{tpu_custom_call.1} parent=59 // pred_check_branch
          %2775 = sbr.rel (%p2773) target = $region72
        $region71: #{tpu_custom_call.1} parent=59 // pred_region
          %2776 = vst.msk [vmem:[#allocation6] sm:$0xff] %vm497, %v2768
          %2777 = vst.msk [vmem:[#allocation6 + $0x8] sm:$0xff] %vm497, %v2769
        $region72: #{tpu_custom_call.1} parent=59 // pred_fallthru
          _
        // Predicated region
        $region73: #{tpu_custom_call.1} parent=59 // pred_check
          %p2778 = pneg %p281
        $region74: #{tpu_custom_call.1} parent=59 // pred_check_branch
          %2780 = sbr.rel (%p2778) target = $region76
        $region75: #{tpu_custom_call.1} parent=59 // pred_region
          %2782 = vsyncadd [#allocation5], 0
          %s2783 = sshll.u32 [#allocation6], 4
          %s2784 = int_to_ptr.vmem [resolvable:$true] %s2783
          %s2785 = sshll.u32 %s10, 4
          %s2786 = int_to_ptr.hbm [resolvable:$true] %s2785
          %2791 = dma.vmem_to_hbm [thread:$0]  %s2784, 256, %s2786, [#allocation5], 128, 128, 8
        $region76: #{tpu_custom_call.1} parent=59 // pred_fallthru
          _
        // Predicated region
        $region77: #{tpu_custom_call.1} parent=59 // pred_check
          %p2792 = pneg %p281
        $region78: #{tpu_custom_call.1} parent=59 // pred_check_branch
          %2794 = sbr.rel (%p2792) target = $region80
        $region79: #{tpu_custom_call.1} parent=59 // pred_region
          %2796 = dma.done [#allocation5], 256
        $region80: #{tpu_custom_call.1} parent=59 // pred_fallthru
          _
      $region60: #{tpu_custom_call.1} parent=5 // pred_fallthru
        _
      %p2797 = scmp.le.s32.totalorder 2, %s18
      // Predicated region
      $region81: #{tpu_custom_call.1} parent=5 // pred_check
        %p2798 = pneg %p2797
      $region82: #{tpu_custom_call.1} parent=5 // pred_check_branch
        %2800 = sbr.rel (%p2798) target = $region84
      $region83: #{tpu_custom_call.1} parent=5 // pred_region
        %s2801 = ssub.s32 %s18, 2
      $region84: #{tpu_custom_call.1} parent=5 // pred_fallthru
        _
    $region6: #{tpu_custom_call.1} parent=1 // loop_footer
      %s22 = sadd.s32 1, %s18
    $region7: #{tpu_custom_call.1} parent=1 // loop_footer_branch
      %17 = sbr.rel target = $region3
    $region8: #{tpu_custom_call.1} parent=1 // loop_exit
      _
    %2802 = vsyncpa [#allocation4], 1
    %s2803 = scalar_lea.sflag [#allocation4], 1
    %2804 = vsyncpa %s2803, 1
    %2805 = vsyncpa [#allocation5], 1
    %s2806 = scalar_lea.sflag [#allocation5], 1
    %2807 = vsyncpa %s2806, 1

</llo_original>
